<compile_context>
chip_gen: v7x
topology: tpu7x:2x2x1
jax: 0.10.0
libtpu: 0.0.40
codegen_flags: <defaults>
</compile_context>

<pallas_src>
import functools

import jax
import jax.numpy as jnp
from jax import lax
from jax.experimental import pallas as pl
from jax.experimental.pallas import tpu as pltpu


# ----------------------------- kernels ------------------------------------ #


def _gate_slices(gates_sig, gates_tanh, Hp):
    """Extract i/f/o from the sigmoid pass and g from the tanh pass."""
    i_g = gates_sig[:, 0 * Hp:1 * Hp]
    f_g = gates_sig[:, 1 * Hp:2 * Hp]
    g_g = gates_tanh[:, 2 * Hp:3 * Hp]
    o_g = gates_sig[:, 3 * Hp:4 * Hp]
    return i_g, f_g, g_g, o_g


def _lstm_kernel_unrolled(x_ref, wih_ref, whh_ref, b_ref, h0_ref, c0_ref,
                          wlin_ref, blin_ref,
                          out_ref, hn_ref, cn_ref):
    """Short-S path: fully register/VMEM-value resident, static Python unroll."""
    S, B, I = x_ref.shape
    Hp = h0_ref.shape[-1]
    Op = out_ref.shape[-1]

    # Hoisted input projection: one (S*B, I) @ (I, 4Hp) matmul + fused bias.
    x_all = x_ref[...].reshape(S * B, I)
    xp = jnp.dot(x_all, wih_ref[...], preferred_element_type=jnp.float32)
    xp = (xp + b_ref[...]).reshape(S, B, 4 * Hp)

    whh = whh_ref[...]                                  # (Hp, 4Hp), loaded once
    h = h0_ref[...]
    c = c0_ref[...]

    hs = []
    for t in range(S):                                  # static unroll
        gates = xp[t] + jnp.dot(h, whh, preferred_element_type=jnp.float32)
        gates_sig = jax.nn.sigmoid(gates)               # one EUP pass
        gates_tanh = jnp.tanh(gates)                    # one EUP pass
        i_g, f_g, g_g, o_g = _gate_slices(gates_sig, gates_tanh, Hp)
        c = f_g * c + i_g * g_g
        h = o_g * jnp.tanh(c)
        hs.append(h)

    hn_ref[...] = h
    cn_ref[...] = c

    # Batched Linear head: one matmul + one lane-dense store.
    hs_all = jnp.stack(hs, axis=0).reshape(S * B, Hp)
    out = jnp.dot(hs_all, wlin_ref[...], preferred_element_type=jnp.float32)
    out = out + blin_ref[...]
    out_ref[...] = out.reshape(S, B, Op).astype(out_ref.dtype)


def _lstm_kernel_looped(x_ref, wih_ref, whh_ref, b_ref, h0_ref, c0_ref,
                        wlin_ref, blin_ref,
                        out_ref, hn_ref, cn_ref,
                        xp_scr, hs_scr):
    """Long-S path: VMEM scratch for xp / h history, partially-unrolled loop."""
    S, B, I = x_ref.shape
    Hp = h0_ref.shape[-1]
    Op = out_ref.shape[-1]

    x_all = x_ref[...].reshape(S * B, I)
    xp = jnp.dot(x_all, wih_ref[...], preferred_element_type=jnp.float32)
    xp = xp + b_ref[...]
    xp_scr[...] = xp.reshape(S, B, 4 * Hp)

    whh = whh_ref[...]

    def step(t, carry):
        h, c = carry
        gates = xp_scr[t] + jnp.dot(h, whh, preferred_element_type=jnp.float32)
        gates_sig = jax.nn.sigmoid(gates)
        gates_tanh = jnp.tanh(gates)
        i_g, f_g, g_g, o_g = _gate_slices(gates_sig, gates_tanh, Hp)
        c_new = f_g * c + i_g * g_g
        h_new = o_g * jnp.tanh(c_new)
        hs_scr[t] = h_new
        return h_new, c_new

    h_last, c_last = lax.fori_loop(
        0, S, step, (h0_ref[...], c0_ref[...]), unroll=min(S, 8))

    hn_ref[...] = h_last
    cn_ref[...] = c_last

    hs_all = hs_scr[...].reshape(S * B, Hp)
    out = jnp.dot(hs_all, wlin_ref[...], preferred_element_type=jnp.float32)
    out = out + blin_ref[...]
    out_ref[...] = out.reshape(S, B, Op).astype(out_ref.dtype)


# ----------------------------- wrapper ------------------------------------ #


def _round_up(n, m):
    return ((n + m - 1) // m) * m


def _pad_gate_cols(w_t, H, Hp):
    """(rows, 4H) -> (rows, 4*Hp) with per-gate zero padding along lanes."""
    if Hp == H:
        return w_t
    rows = w_t.shape[0]
    w4 = w_t.reshape(rows, 4, H)
    w4 = jnp.pad(w4, ((0, 0), (0, 0), (0, Hp - H)))
    return w4.reshape(rows, 4 * Hp)


def lstm_model_forward(x, hidden, params):
    """x: (B, S, I) batch_first; hidden: (h0, c0), each (1, B, H).

    Returns (out, (hn, cn)) with out: (B, S, O), hn/cn: (1, B, H), matching
    PyTorch LSTMModel.forward for the single-layer unidirectional case."""
    w_ih, w_hh, b_ih, b_hh, w_lin, b_lin = (
        params["w_ih"], params["w_hh"], params["b_ih"], params["b_hh"],
        params["w_lin"], params["b_lin"])

    B, S, I = x.shape
    H = w_hh.shape[1]
    O = w_lin.shape[0]

    # Sublane-align batch, lane-align hidden / output dims.
    B_pad = _round_up(B, 8)
    H_pad = _round_up(H, 128)
    O_pad = _round_up(O, 128)

    x_f = x.astype(jnp.float32)
    h0 = hidden[0][0].astype(jnp.float32)                       # (B, H)
    c0 = hidden[1][0].astype(jnp.float32)                       # (B, H)
    if B_pad != B:
        x_f = jnp.pad(x_f, ((0, B_pad - B), (0, 0), (0, 0)))
        h0 = jnp.pad(h0, ((0, B_pad - B), (0, 0)))
        c0 = jnp.pad(c0, ((0, B_pad - B), (0, 0)))
    if H_pad != H:
        h0 = jnp.pad(h0, ((0, 0), (0, H_pad - H)))
        c0 = jnp.pad(c0, ((0, 0), (0, H_pad - H)))

    x_tm = jnp.transpose(x_f, (1, 0, 2))                        # (S, B_pad, I)

    # Weights: transpose for (rows, 4H) layout, per-gate lane padding.
    wih_t = _pad_gate_cols(jnp.transpose(w_ih).astype(jnp.float32), H, H_pad)
    whh_t = _pad_gate_cols(jnp.transpose(w_hh).astype(jnp.float32), H, H_pad)
    if H_pad != H:
        whh_t = jnp.pad(whh_t, ((0, H_pad - H), (0, 0)))        # zero rows
    b_gates = _pad_gate_cols(
        (b_ih + b_hh).astype(jnp.float32)[None, :], H, H_pad)   # (1, 4*H_pad)

    wlin_t = jnp.transpose(w_lin).astype(jnp.float32)           # (H, O)
    wlin_t = jnp.pad(wlin_t, ((0, H_pad - H), (0, O_pad - O)))  # zero rows/cols
    blin = jnp.pad(b_lin.astype(jnp.float32), (0, O_pad - O))[None, :]

    unrolled = S <= 16
    kernel = _lstm_kernel_unrolled if unrolled else _lstm_kernel_looped
    scratch_shapes = [] if unrolled else [
        pltpu.VMEM((S, B_pad, 4 * H_pad), jnp.float32),         # x-projection
        pltpu.VMEM((S, B_pad, H_pad), jnp.float32),             # h_t history
    ]

    # Explicit VMEM limit sized from the actual footprint (+headroom).
    f32 = 4
    vmem_need = f32 * (
        S * B_pad * I
        + I * 4 * H_pad + H_pad * 4 * H_pad + 4 * H_pad
        + 2 * B_pad * H_pad
        + H_pad * O_pad + O_pad
        + S * B_pad * O_pad
        + 2 * B_pad * H_pad
        + S * B_pad * 4 * H_pad            # xp (scratch or traced value)
        + S * B_pad * H_pad)               # h history (scratch or traced value)
    vmem_limit = int(min(max(2 * vmem_need, 16 << 20), 48 << 20))

    out_tm, hn, cn = pl.pallas_call(
        kernel,
        out_shape=(
            jax.ShapeDtypeStruct((S, B_pad, O_pad), jnp.float32),
            jax.ShapeDtypeStruct((B_pad, H_pad), jnp.float32),
            jax.ShapeDtypeStruct((B_pad, H_pad), jnp.float32),
        ),
        scratch_shapes=scratch_shapes,
        input_output_aliases={4: 1, 5: 2},          # h0 -> hn, c0 -> cn
        compiler_params=pltpu.CompilerParams(vmem_limit_bytes=vmem_limit),
    )(x_tm, wih_t, whh_t, b_gates, h0, c0, wlin_t, blin)

    out = jnp.transpose(out_tm, (1, 0, 2))[:B, :, :O]           # (B, S, O)
    hn = hn[:B, :H][None]
    cn = cn[:B, :H][None]
    return out, (hn, cn)


# ----------------------------- reference ---------------------------------- #


def _reference_forward(x, hidden, params):
    """Pure-JAX reference (lax.scan) of the same forward."""
    w_ih, w_hh, b_ih, b_hh, w_lin, b_lin = (
        params["w_ih"], params["w_hh"], params["b_ih"], params["b_hh"],
        params["w_lin"], params["b_lin"])
    H = w_hh.shape[1]
    h0, c0 = hidden[0][0], hidden[1][0]
    x_tm = jnp.transpose(x, (1, 0, 2))

    def step(carry, x_t):
        h, c = carry
        gates = x_t @ w_ih.T + h @ w_hh.T + b_ih + b_hh
        i = jax.nn.sigmoid(gates[:, 0 * H:1 * H])
        f = jax.nn.sigmoid(gates[:, 1 * H:2 * H])
        g = jnp.tanh(gates[:, 2 * H:3 * H])
        o = jax.nn.sigmoid(gates[:, 3 * H:4 * H])
        c_new = f * c + i * g
        h_new = o * jnp.tanh(c_new)
        return (h_new, c_new), h_new

    (hn, cn), hs = lax.scan(step, (h0, c0), x_tm)
    out = hs @ w_lin.T + b_lin
    return jnp.transpose(out, (1, 0, 2)), (hn[None], cn[None])


def make_params(key, input_size, hidden_size, output_size):
    """Deterministic PyTorch-style uniform(-1/sqrt(H), 1/sqrt(H)) init."""
    ks = jax.random.split(key, 6)
    s = 1.0 / jnp.sqrt(hidden_size)
    u = lambda k, shape: jax.random.uniform(k, shape, jnp.float32, -s, s)
    return {
        "w_ih": u(ks[0], (4 * hidden_size, input_size)),
        "w_hh": u(ks[1], (4 * hidden_size, hidden_size)),
        "b_ih": u(ks[2], (4 * hidden_size,)),
        "b_hh": u(ks[3], (4 * hidden_size,)),
        "w_lin": u(ks[4], (output_size, hidden_size)),
        "b_lin": u(ks[5], (output_size,)),
    }


if __name__ == "__main__":
    # Small shapes consistent with LSTMModel(input_size, hidden, out, 1, 1)
    B, S, I, H, O = 4, 8, 8, 32, 4

    key = jax.random.PRNGKey(0)
    kx, kp = jax.random.split(key)
    x = jax.random.normal(kx, (B, S, I), dtype=jnp.float32)
    params = make_params(kp, I, H, O)

    # init_hidden: zeros (layers*num_directions, B, H)
    h0 = jnp.zeros((1, B, H), jnp.float32)
    c0 = jnp.zeros((1, B, H), jnp.float32)

    out, (hn, cn) = lstm_model_forward(x, (h0, c0), params)
    out = jax.block_until_ready(out)
    hn = jax.block_until_ready(hn)
    cn = jax.block_until_ready(cn)

    # Sanity check against pure-JAX reference.
    ref_out, (ref_hn, ref_cn) = _reference_forward(x, (h0, c0), params)
    assert out.shape == (B, S, O)
    assert hn.shape == (1, B, H) and cn.shape == (1, B, H)
    assert jnp.allclose(out, ref_out, atol=1e-5, rtol=1e-5)
    assert jnp.allclose(hn, ref_hn, atol=1e-5, rtol=1e-5)
    assert jnp.allclose(cn, ref_cn, atol=1e-5, rtol=1e-5)

    print("KERNEL_OK")
</pallas_src>

<mosaic_0001>
module attributes {stable_mosaic.version = 11 : i64} {
  func.func @_lstm_kernel_unrolled(%arg0: memref<8x8x8xf32, #tpu.memory_space<vmem>>, %arg1: memref<8x512xf32, #tpu.memory_space<vmem>>, %arg2: memref<128x512xf32, #tpu.memory_space<vmem>>, %arg3: memref<1x512xf32, #tpu.memory_space<vmem>>, %arg4: memref<8x128xf32, #tpu.memory_space<vmem>>, %arg5: memref<8x128xf32, #tpu.memory_space<vmem>>, %arg6: memref<128x128xf32, #tpu.memory_space<vmem>>, %arg7: memref<1x128xf32, #tpu.memory_space<vmem>>, %arg8: memref<8x8x128xf32, #tpu.memory_space<vmem>>, %arg9: memref<8x128xf32, #tpu.memory_space<vmem>>, %arg10: memref<8x128xf32, #tpu.memory_space<vmem>>) attributes {dimension_semantics = [], scalar_prefetch = 0 : i64, scratch_operands = 0 : i64, tpu.core_type = #tpu.core_type<tc>} {
    %c0 = arith.constant 0 : index
    %c0_0 = arith.constant 0 : index
    %c0_1 = arith.constant 0 : index
    %0 = vector.load %arg0[%c0, %c0_0, %c0_1] : memref<8x8x8xf32, #tpu.memory_space<vmem>>, vector<8x8x8xf32>
    %1 = vector.shape_cast %0 : vector<8x8x8xf32> to vector<64x8xf32>
    %c0_2 = arith.constant 0 : index
    %c0_3 = arith.constant 0 : index
    %2 = vector.load %arg1[%c0_2, %c0_3] : memref<8x512xf32, #tpu.memory_space<vmem>>, vector<8x512xf32>
    %cst = arith.constant dense<0.000000e+00> : vector<64x512xf32>
    %3 = tpu.matmul %1, %2, %cst {dimension_numbers = #tpu.dot_dimension_numbers<[1], [0], [0], [1], [0, 0, 1, 1], [], []>} : vector<64x8xf32>, vector<8x512xf32>, vector<64x512xf32> -> vector<64x512xf32>
    %c0_4 = arith.constant 0 : index
    %c0_5 = arith.constant 0 : index
    %4 = vector.load %arg3[%c0_4, %c0_5] : memref<1x512xf32, #tpu.memory_space<vmem>>, vector<1x512xf32>
    %5 = vector.broadcast %4 : vector<1x512xf32> to vector<64x512xf32>
    %6 = arith.addf %3, %5 : vector<64x512xf32>
    %7 = vector.shape_cast %6 : vector<64x512xf32> to vector<8x8x512xf32>
    %c0_6 = arith.constant 0 : index
    %c0_7 = arith.constant 0 : index
    %8 = vector.load %arg2[%c0_6, %c0_7] : memref<128x512xf32, #tpu.memory_space<vmem>>, vector<128x512xf32>
    %c0_8 = arith.constant 0 : index
    %c0_9 = arith.constant 0 : index
    %9 = vector.load %arg4[%c0_8, %c0_9] : memref<8x128xf32, #tpu.memory_space<vmem>>, vector<8x128xf32>
    %c0_10 = arith.constant 0 : index
    %c0_11 = arith.constant 0 : index
    %10 = vector.load %arg5[%c0_10, %c0_11] : memref<8x128xf32, #tpu.memory_space<vmem>>, vector<8x128xf32>
    %11 = vector.extract_strided_slice %7 {offsets = [0, 0, 0], sizes = [1, 8, 512], strides = [1, 1, 1]} : vector<8x8x512xf32> to vector<1x8x512xf32>
    %12 = vector.shape_cast %11 : vector<1x8x512xf32> to vector<8x512xf32>
    %cst_12 = arith.constant dense<0.000000e+00> : vector<8x512xf32>
    %13 = tpu.matmul %9, %8, %cst_12 {dimension_numbers = #tpu.dot_dimension_numbers<[1], [0], [0], [1], [0, 0, 1, 1], [], []>} : vector<8x128xf32>, vector<128x512xf32>, vector<8x512xf32> -> vector<8x512xf32>
    %14 = arith.addf %12, %13 : vector<8x512xf32>
    %15 = arith.negf %14 : vector<8x512xf32>
    %16 = math.exp %15 : vector<8x512xf32>
    %cst_13 = arith.constant 1.000000e+00 : f32
    %17 = vector.broadcast %cst_13 : f32 to vector<8x512xf32>
    %18 = arith.addf %17, %16 : vector<8x512xf32>
    %19 = arith.divf %17, %18 : vector<8x512xf32>
    %20 = math.tanh %14 : vector<8x512xf32>
    %21 = vector.extract_strided_slice %19 {offsets = [0, 0], sizes = [8, 128], strides = [1, 1]} : vector<8x512xf32> to vector<8x128xf32>
    %22 = vector.extract_strided_slice %19 {offsets = [0, 128], sizes = [8, 128], strides = [1, 1]} : vector<8x512xf32> to vector<8x128xf32>
    %23 = vector.extract_strided_slice %20 {offsets = [0, 256], sizes = [8, 128], strides = [1, 1]} : vector<8x512xf32> to vector<8x128xf32>
    %24 = vector.extract_strided_slice %19 {offsets = [0, 384], sizes = [8, 128], strides = [1, 1]} : vector<8x512xf32> to vector<8x128xf32>
    %25 = arith.mulf %22, %10 : vector<8x128xf32>
    %26 = arith.mulf %21, %23 : vector<8x128xf32>
    %27 = arith.addf %25, %26 : vector<8x128xf32>
    %28 = math.tanh %27 : vector<8x128xf32>
    %29 = arith.mulf %24, %28 : vector<8x128xf32>
    %30 = vector.extract_strided_slice %7 {offsets = [1, 0, 0], sizes = [1, 8, 512], strides = [1, 1, 1]} : vector<8x8x512xf32> to vector<1x8x512xf32>
    %31 = vector.shape_cast %30 : vector<1x8x512xf32> to vector<8x512xf32>
    %cst_14 = arith.constant dense<0.000000e+00> : vector<8x512xf32>
    %32 = tpu.matmul %29, %8, %cst_14 {dimension_numbers = #tpu.dot_dimension_numbers<[1], [0], [0], [1], [0, 0, 1, 1], [], []>} : vector<8x128xf32>, vector<128x512xf32>, vector<8x512xf32> -> vector<8x512xf32>
    %33 = arith.addf %31, %32 : vector<8x512xf32>
    %34 = arith.negf %33 : vector<8x512xf32>
    %35 = math.exp %34 : vector<8x512xf32>
    %cst_15 = arith.constant 1.000000e+00 : f32
    %36 = vector.broadcast %cst_15 : f32 to vector<8x512xf32>
    %37 = arith.addf %36, %35 : vector<8x512xf32>
    %38 = arith.divf %36, %37 : vector<8x512xf32>
    %39 = math.tanh %33 : vector<8x512xf32>
    %40 = vector.extract_strided_slice %38 {offsets = [0, 0], sizes = [8, 128], strides = [1, 1]} : vector<8x512xf32> to vector<8x128xf32>
    %41 = vector.extract_strided_slice %38 {offsets = [0, 128], sizes = [8, 128], strides = [1, 1]} : vector<8x512xf32> to vector<8x128xf32>
    %42 = vector.extract_strided_slice %39 {offsets = [0, 256], sizes = [8, 128], strides = [1, 1]} : vector<8x512xf32> to vector<8x128xf32>
    %43 = vector.extract_strided_slice %38 {offsets = [0, 384], sizes = [8, 128], strides = [1, 1]} : vector<8x512xf32> to vector<8x128xf32>
    %44 = arith.mulf %41, %27 : vector<8x128xf32>
    %45 = arith.mulf %40, %42 : vector<8x128xf32>
    %46 = arith.addf %44, %45 : vector<8x128xf32>
    %47 = math.tanh %46 : vector<8x128xf32>
    %48 = arith.mulf %43, %47 : vector<8x128xf32>
    %49 = vector.extract_strided_slice %7 {offsets = [2, 0, 0], sizes = [1, 8, 512], strides = [1, 1, 1]} : vector<8x8x512xf32> to vector<1x8x512xf32>
    %50 = vector.shape_cast %49 : vector<1x8x512xf32> to vector<8x512xf32>
    %cst_16 = arith.constant dense<0.000000e+00> : vector<8x512xf32>
    %51 = tpu.matmul %48, %8, %cst_16 {dimension_numbers = #tpu.dot_dimension_numbers<[1], [0], [0], [1], [0, 0, 1, 1], [], []>} : vector<8x128xf32>, vector<128x512xf32>, vector<8x512xf32> -> vector<8x512xf32>
    %52 = arith.addf %50, %51 : vector<8x512xf32>
    %53 = arith.negf %52 : vector<8x512xf32>
    %54 = math.exp %53 : vector<8x512xf32>
    %cst_17 = arith.constant 1.000000e+00 : f32
    %55 = vector.broadcast %cst_17 : f32 to vector<8x512xf32>
    %56 = arith.addf %55, %54 : vector<8x512xf32>
    %57 = arith.divf %55, %56 : vector<8x512xf32>
    %58 = math.tanh %52 : vector<8x512xf32>
    %59 = vector.extract_strided_slice %57 {offsets = [0, 0], sizes = [8, 128], strides = [1, 1]} : vector<8x512xf32> to vector<8x128xf32>
    %60 = vector.extract_strided_slice %57 {offsets = [0, 128], sizes = [8, 128], strides = [1, 1]} : vector<8x512xf32> to vector<8x128xf32>
    %61 = vector.extract_strided_slice %58 {offsets = [0, 256], sizes = [8, 128], strides = [1, 1]} : vector<8x512xf32> to vector<8x128xf32>
    %62 = vector.extract_strided_slice %57 {offsets = [0, 384], sizes = [8, 128], strides = [1, 1]} : vector<8x512xf32> to vector<8x128xf32>
    %63 = arith.mulf %60, %46 : vector<8x128xf32>
    %64 = arith.mulf %59, %61 : vector<8x128xf32>
    %65 = arith.addf %63, %64 : vector<8x128xf32>
    %66 = math.tanh %65 : vector<8x128xf32>
    %67 = arith.mulf %62, %66 : vector<8x128xf32>
    %68 = vector.extract_strided_slice %7 {offsets = [3, 0, 0], sizes = [1, 8, 512], strides = [1, 1, 1]} : vector<8x8x512xf32> to vector<1x8x512xf32>
    %69 = vector.shape_cast %68 : vector<1x8x512xf32> to vector<8x512xf32>
    %cst_18 = arith.constant dense<0.000000e+00> : vector<8x512xf32>
    %70 = tpu.matmul %67, %8, %cst_18 {dimension_numbers = #tpu.dot_dimension_numbers<[1], [0], [0], [1], [0, 0, 1, 1], [], []>} : vector<8x128xf32>, vector<128x512xf32>, vector<8x512xf32> -> vector<8x512xf32>
    %71 = arith.addf %69, %70 : vector<8x512xf32>
    %72 = arith.negf %71 : vector<8x512xf32>
    %73 = math.exp %72 : vector<8x512xf32>
    %cst_19 = arith.constant 1.000000e+00 : f32
    %74 = vector.broadcast %cst_19 : f32 to vector<8x512xf32>
    %75 = arith.addf %74, %73 : vector<8x512xf32>
    %76 = arith.divf %74, %75 : vector<8x512xf32>
    %77 = math.tanh %71 : vector<8x512xf32>
    %78 = vector.extract_strided_slice %76 {offsets = [0, 0], sizes = [8, 128], strides = [1, 1]} : vector<8x512xf32> to vector<8x128xf32>
    %79 = vector.extract_strided_slice %76 {offsets = [0, 128], sizes = [8, 128], strides = [1, 1]} : vector<8x512xf32> to vector<8x128xf32>
    %80 = vector.extract_strided_slice %77 {offsets = [0, 256], sizes = [8, 128], strides = [1, 1]} : vector<8x512xf32> to vector<8x128xf32>
    %81 = vector.extract_strided_slice %76 {offsets = [0, 384], sizes = [8, 128], strides = [1, 1]} : vector<8x512xf32> to vector<8x128xf32>
    %82 = arith.mulf %79, %65 : vector<8x128xf32>
    %83 = arith.mulf %78, %80 : vector<8x128xf32>
    %84 = arith.addf %82, %83 : vector<8x128xf32>
    %85 = math.tanh %84 : vector<8x128xf32>
    %86 = arith.mulf %81, %85 : vector<8x128xf32>
    %87 = vector.extract_strided_slice %7 {offsets = [4, 0, 0], sizes = [1, 8, 512], strides = [1, 1, 1]} : vector<8x8x512xf32> to vector<1x8x512xf32>
    %88 = vector.shape_cast %87 : vector<1x8x512xf32> to vector<8x512xf32>
    %cst_20 = arith.constant dense<0.000000e+00> : vector<8x512xf32>
    %89 = tpu.matmul %86, %8, %cst_20 {dimension_numbers = #tpu.dot_dimension_numbers<[1], [0], [0], [1], [0, 0, 1, 1], [], []>} : vector<8x128xf32>, vector<128x512xf32>, vector<8x512xf32> -> vector<8x512xf32>
    %90 = arith.addf %88, %89 : vector<8x512xf32>
    %91 = arith.negf %90 : vector<8x512xf32>
    %92 = math.exp %91 : vector<8x512xf32>
    %cst_21 = arith.constant 1.000000e+00 : f32
    %93 = vector.broadcast %cst_21 : f32 to vector<8x512xf32>
    %94 = arith.addf %93, %92 : vector<8x512xf32>
    %95 = arith.divf %93, %94 : vector<8x512xf32>
    %96 = math.tanh %90 : vector<8x512xf32>
    %97 = vector.extract_strided_slice %95 {offsets = [0, 0], sizes = [8, 128], strides = [1, 1]} : vector<8x512xf32> to vector<8x128xf32>
    %98 = vector.extract_strided_slice %95 {offsets = [0, 128], sizes = [8, 128], strides = [1, 1]} : vector<8x512xf32> to vector<8x128xf32>
    %99 = vector.extract_strided_slice %96 {offsets = [0, 256], sizes = [8, 128], strides = [1, 1]} : vector<8x512xf32> to vector<8x128xf32>
    %100 = vector.extract_strided_slice %95 {offsets = [0, 384], sizes = [8, 128], strides = [1, 1]} : vector<8x512xf32> to vector<8x128xf32>
    %101 = arith.mulf %98, %84 : vector<8x128xf32>
    %102 = arith.mulf %97, %99 : vector<8x128xf32>
    %103 = arith.addf %101, %102 : vector<8x128xf32>
    %104 = math.tanh %103 : vector<8x128xf32>
    %105 = arith.mulf %100, %104 : vector<8x128xf32>
    %106 = vector.extract_strided_slice %7 {offsets = [5, 0, 0], sizes = [1, 8, 512], strides = [1, 1, 1]} : vector<8x8x512xf32> to vector<1x8x512xf32>
    %107 = vector.shape_cast %106 : vector<1x8x512xf32> to vector<8x512xf32>
    %cst_22 = arith.constant dense<0.000000e+00> : vector<8x512xf32>
    %108 = tpu.matmul %105, %8, %cst_22 {dimension_numbers = #tpu.dot_dimension_numbers<[1], [0], [0], [1], [0, 0, 1, 1], [], []>} : vector<8x128xf32>, vector<128x512xf32>, vector<8x512xf32> -> vector<8x512xf32>
    %109 = arith.addf %107, %108 : vector<8x512xf32>
    %110 = arith.negf %109 : vector<8x512xf32>
    %111 = math.exp %110 : vector<8x512xf32>
    %cst_23 = arith.constant 1.000000e+00 : f32
    %112 = vector.broadcast %cst_23 : f32 to vector<8x512xf32>
    %113 = arith.addf %112, %111 : vector<8x512xf32>
    %114 = arith.divf %112, %113 : vector<8x512xf32>
    %115 = math.tanh %109 : vector<8x512xf32>
    %116 = vector.extract_strided_slice %114 {offsets = [0, 0], sizes = [8, 128], strides = [1, 1]} : vector<8x512xf32> to vector<8x128xf32>
    %117 = vector.extract_strided_slice %114 {offsets = [0, 128], sizes = [8, 128], strides = [1, 1]} : vector<8x512xf32> to vector<8x128xf32>
    %118 = vector.extract_strided_slice %115 {offsets = [0, 256], sizes = [8, 128], strides = [1, 1]} : vector<8x512xf32> to vector<8x128xf32>
    %119 = vector.extract_strided_slice %114 {offsets = [0, 384], sizes = [8, 128], strides = [1, 1]} : vector<8x512xf32> to vector<8x128xf32>
    %120 = arith.mulf %117, %103 : vector<8x128xf32>
    %121 = arith.mulf %116, %118 : vector<8x128xf32>
    %122 = arith.addf %120, %121 : vector<8x128xf32>
    %123 = math.tanh %122 : vector<8x128xf32>
    %124 = arith.mulf %119, %123 : vector<8x128xf32>
    %125 = vector.extract_strided_slice %7 {offsets = [6, 0, 0], sizes = [1, 8, 512], strides = [1, 1, 1]} : vector<8x8x512xf32> to vector<1x8x512xf32>
    %126 = vector.shape_cast %125 : vector<1x8x512xf32> to vector<8x512xf32>
    %cst_24 = arith.constant dense<0.000000e+00> : vector<8x512xf32>
    %127 = tpu.matmul %124, %8, %cst_24 {dimension_numbers = #tpu.dot_dimension_numbers<[1], [0], [0], [1], [0, 0, 1, 1], [], []>} : vector<8x128xf32>, vector<128x512xf32>, vector<8x512xf32> -> vector<8x512xf32>
    %128 = arith.addf %126, %127 : vector<8x512xf32>
    %129 = arith.negf %128 : vector<8x512xf32>
    %130 = math.exp %129 : vector<8x512xf32>
    %cst_25 = arith.constant 1.000000e+00 : f32
    %131 = vector.broadcast %cst_25 : f32 to vector<8x512xf32>
    %132 = arith.addf %131, %130 : vector<8x512xf32>
    %133 = arith.divf %131, %132 : vector<8x512xf32>
    %134 = math.tanh %128 : vector<8x512xf32>
    %135 = vector.extract_strided_slice %133 {offsets = [0, 0], sizes = [8, 128], strides = [1, 1]} : vector<8x512xf32> to vector<8x128xf32>
    %136 = vector.extract_strided_slice %133 {offsets = [0, 128], sizes = [8, 128], strides = [1, 1]} : vector<8x512xf32> to vector<8x128xf32>
    %137 = vector.extract_strided_slice %134 {offsets = [0, 256], sizes = [8, 128], strides = [1, 1]} : vector<8x512xf32> to vector<8x128xf32>
    %138 = vector.extract_strided_slice %133 {offsets = [0, 384], sizes = [8, 128], strides = [1, 1]} : vector<8x512xf32> to vector<8x128xf32>
    %139 = arith.mulf %136, %122 : vector<8x128xf32>
    %140 = arith.mulf %135, %137 : vector<8x128xf32>
    %141 = arith.addf %139, %140 : vector<8x128xf32>
    %142 = math.tanh %141 : vector<8x128xf32>
    %143 = arith.mulf %138, %142 : vector<8x128xf32>
    %144 = vector.extract_strided_slice %7 {offsets = [7, 0, 0], sizes = [1, 8, 512], strides = [1, 1, 1]} : vector<8x8x512xf32> to vector<1x8x512xf32>
    %145 = vector.shape_cast %144 : vector<1x8x512xf32> to vector<8x512xf32>
    %cst_26 = arith.constant dense<0.000000e+00> : vector<8x512xf32>
    %146 = tpu.matmul %143, %8, %cst_26 {dimension_numbers = #tpu.dot_dimension_numbers<[1], [0], [0], [1], [0, 0, 1, 1], [], []>} : vector<8x128xf32>, vector<128x512xf32>, vector<8x512xf32> -> vector<8x512xf32>
    %147 = arith.addf %145, %146 : vector<8x512xf32>
    %148 = arith.negf %147 : vector<8x512xf32>
    %149 = math.exp %148 : vector<8x512xf32>
    %cst_27 = arith.constant 1.000000e+00 : f32
    %150 = vector.broadcast %cst_27 : f32 to vector<8x512xf32>
    %151 = arith.addf %150, %149 : vector<8x512xf32>
    %152 = arith.divf %150, %151 : vector<8x512xf32>
    %153 = math.tanh %147 : vector<8x512xf32>
    %154 = vector.extract_strided_slice %152 {offsets = [0, 0], sizes = [8, 128], strides = [1, 1]} : vector<8x512xf32> to vector<8x128xf32>
    %155 = vector.extract_strided_slice %152 {offsets = [0, 128], sizes = [8, 128], strides = [1, 1]} : vector<8x512xf32> to vector<8x128xf32>
    %156 = vector.extract_strided_slice %153 {offsets = [0, 256], sizes = [8, 128], strides = [1, 1]} : vector<8x512xf32> to vector<8x128xf32>
    %157 = vector.extract_strided_slice %152 {offsets = [0, 384], sizes = [8, 128], strides = [1, 1]} : vector<8x512xf32> to vector<8x128xf32>
    %158 = arith.mulf %155, %141 : vector<8x128xf32>
    %159 = arith.mulf %154, %156 : vector<8x128xf32>
    %160 = arith.addf %158, %159 : vector<8x128xf32>
    %161 = math.tanh %160 : vector<8x128xf32>
    %162 = arith.mulf %157, %161 : vector<8x128xf32>
    %c0_28 = arith.constant 0 : index
    %c0_29 = arith.constant 0 : index
    %163 = vector.load %arg9[%c0_28, %c0_29] : memref<8x128xf32, #tpu.memory_space<vmem>>, vector<8x128xf32>
    tpu.vector_store %arg9[%c0_28, %c0_29], %162 {strides = array<i32>} : memref<8x128xf32, #tpu.memory_space<vmem>>, vector<8x128xf32>,
    %c0_30 = arith.constant 0 : index
    %c0_31 = arith.constant 0 : index
    %164 = vector.load %arg10[%c0_30, %c0_31] : memref<8x128xf32, #tpu.memory_space<vmem>>, vector<8x128xf32>
    tpu.vector_store %arg10[%c0_30, %c0_31], %160 {strides = array<i32>} : memref<8x128xf32, #tpu.memory_space<vmem>>, vector<8x128xf32>,
    %165 = vector.shape_cast %29 : vector<8x128xf32> to vector<1x8x128xf32>
    %166 = vector.shape_cast %48 : vector<8x128xf32> to vector<1x8x128xf32>
    %167 = vector.shape_cast %67 : vector<8x128xf32> to vector<1x8x128xf32>
    %168 = vector.shape_cast %86 : vector<8x128xf32> to vector<1x8x128xf32>
    %169 = vector.shape_cast %105 : vector<8x128xf32> to vector<1x8x128xf32>
    %170 = vector.shape_cast %124 : vector<8x128xf32> to vector<1x8x128xf32>
    %171 = vector.shape_cast %143 : vector<8x128xf32> to vector<1x8x128xf32>
    %172 = vector.shape_cast %162 : vector<8x128xf32> to vector<1x8x128xf32>
    %173 = tpu.concatenate %165, %166, %167, %168, %169, %170, %171, %172 in 0 : vector<1x8x128xf32>, vector<1x8x128xf32>, vector<1x8x128xf32>, vector<1x8x128xf32>, vector<1x8x128xf32>, vector<1x8x128xf32>, vector<1x8x128xf32>, vector<1x8x128xf32> -> vector<8x8x128xf32>
    %174 = vector.shape_cast %173 : vector<8x8x128xf32> to vector<64x128xf32>
    %c0_32 = arith.constant 0 : index
    %c0_33 = arith.constant 0 : index
    %175 = vector.load %arg6[%c0_32, %c0_33] : memref<128x128xf32, #tpu.memory_space<vmem>>, vector<128x128xf32>
    %cst_34 = arith.constant dense<0.000000e+00> : vector<64x128xf32>
    %176 = tpu.matmul %174, %175, %cst_34 {dimension_numbers = #tpu.dot_dimension_numbers<[1], [0], [0], [1], [0, 0, 1, 1], [], []>} : vector<64x128xf32>, vector<128x128xf32>, vector<64x128xf32> -> vector<64x128xf32>
    %c0_35 = arith.constant 0 : index
    %c0_36 = arith.constant 0 : index
    %177 = vector.load %arg7[%c0_35, %c0_36] : memref<1x128xf32, #tpu.memory_space<vmem>>, vector<1x128xf32>
    %178 = vector.broadcast %177 : vector<1x128xf32> to vector<64x128xf32>
    %179 = arith.addf %176, %178 : vector<64x128xf32>
    %180 = vector.shape_cast %179 : vector<64x128xf32> to vector<8x8x128xf32>
    %c0_37 = arith.constant 0 : index
    %c0_38 = arith.constant 0 : index
    %c0_39 = arith.constant 0 : index
    %181 = vector.load %arg8[%c0_37, %c0_38, %c0_39] : memref<8x8x128xf32, #tpu.memory_space<vmem>>, vector<8x8x128xf32>
    tpu.vector_store %arg8[%c0_37, %c0_38, %c0_39], %180 {strides = array<i32>} : memref<8x8x128xf32, #tpu.memory_space<vmem>>, vector<8x8x128xf32>,
    return
  }
}

</mosaic_0001>

<llo_original>
// kernel: tpu_custom_call.1
$region0: #{tpu_custom_call.1}
  #allocation0 [shape = 'u32[]', space=smem, size = 0x4, offset = 0x4, fixed_abs, tag = 'smem constant byte address 0x4 - core index']
  #allocation1 [shape = 'u32[144,128]{1,0:T(1,128)}', space=vmem, size = 0x12000, scoped, tag = 'internal scratch']
  %s0 = inlined_call_operand.hbm [shape: f32[8,8,8], index: 0, kind: input, shape index: {}]
  %s1 = inlined_call_operand.vmem [shape: f32[8,512], index: 1, kind: input, shape index: {}]
  %s2 = inlined_call_operand.hbm [shape: f32[128,512], index: 2, kind: input, shape index: {}]
  %s3 = inlined_call_operand.vmem [shape: f32[1,512], index: 3, kind: input, shape index: {}]
  %s4 = inlined_call_operand.hbm [shape: f32[8,128], index: 4, kind: input, shape index: {}, may-alias: {4,9}]
  %s5 = inlined_call_operand.hbm [shape: f32[8,128], index: 5, kind: input, shape index: {}, may-alias: {5,10}]
  %s6 = inlined_call_operand.hbm [shape: f32[128,128], index: 6, kind: input, shape index: {}]
  %s7 = inlined_call_operand.vmem [shape: f32[1,128], index: 7, kind: input, shape index: {}]
  %s8 = inlined_call_operand.hbm [shape: f32[8,8,128], index: 8, kind: output, shape index: {0}]
  %s9 = inlined_call_operand.hbm [shape: f32[8,128], index: 9, kind: output, shape index: {1}, may-alias: {4,9}]
  %s10 = inlined_call_operand.hbm [shape: f32[8,128], index: 10, kind: output, shape index: {2}, may-alias: {5,10}]
  %11 = xla_tuple %s8, %s9, %s10
  %s12 = sld [smem:[#allocation0]]
  $region78: #{tpu_custom_call.1} parent=0
    _
  %s14 = ssub.s32 1, %s12
  %s15 = scalar_select 0, %s14, %s12
  $region1: #{tpu_custom_call.1} parent=0
    #allocation2 [shape = 'u8[32768]{0}', space=vmem, size = 0x8000, scoped, tag = 'input window, operand 0, single buffered']
    #allocation3 [shape = 's32[1]{0}', space=sflag, size = 0x4, scoped, tag = 'scoped memory for tpu_custom_call.1']
    #allocation4 [shape = 's32[1]{0}', space=sflag, size = 0x4, scoped, tag = 'scoped memory for tpu_custom_call.1']
    #allocation5 [shape = 'u8[262144]{0}', space=vmem, size = 0x40000, scoped, tag = 'input window, operand 2, single buffered']
    #allocation6 [shape = 's32[1]{0}', space=sflag, size = 0x4, scoped, tag = 'scoped memory for tpu_custom_call.1']
    #allocation7 [shape = 'u8[4096]{0}', space=vmem, size = 0x1000, scoped, tag = 'input window, operand 4, single buffered']
    #allocation8 [shape = 'u8[4096]{0}', space=vmem, size = 0x1000, scoped, tag = 'input window, operand 5, single buffered']
    #allocation9 [shape = 's32[1]{0}', space=sflag, size = 0x4, scoped, tag = 'scoped memory for tpu_custom_call.1']
    #allocation10 [shape = 'u8[65536]{0}', space=vmem, size = 0x10000, scoped, tag = 'input window, operand 6, single buffered']
    #allocation11 [shape = 'u8[32768]{0}', space=vmem, size = 0x8000, scoped, tag = 'output window, operand 0, single buffered']
    #allocation12 [shape = 'u8[4096]{0}', space=vmem, size = 0x1000, scoped, tag = 'output window, operand 1, single buffered']
    #allocation13 [shape = 's32[1]{0}', space=sflag, size = 0x4, scoped, tag = 'scoped memory for tpu_custom_call.1']
    #allocation14 [shape = 'u8[4096]{0}', space=vmem, size = 0x1000, scoped, tag = 'output window, operand 2, single buffered']
    %16 = vsyncpa [#allocation3], 0
    %17 = vsyncpa [#allocation6], 0
    %18 = vsyncpa [#allocation9], 0
    %19 = vsyncpa [#allocation4], 0
    %20 = vsyncpa [#allocation13], 0
    // Predicated region
    $region2: #{tpu_custom_call.1} parent=1 // pred_check
      _
    $region3: #{tpu_custom_call.1} parent=1 // pred_check_branch
      %22 = sbr.rel (0) target = $region5
    $region4: #{tpu_custom_call.1} parent=1 // pred_region
      %s24 = ssub.s32 1024, 1024
      %25 = vsyncadd [#allocation3], %s24
      %s26 = sshll.u32 [#allocation2], 4
      %s27 = int_to_ptr.vmem [resolvable:$true] %s26
      %32 = dma.hbm_to_vmem [thread:$0]  %s0, 1024, %s27, [#allocation3], 128, 128, 8
    $region5: #{tpu_custom_call.1} parent=1 // pred_fallthru
      _
    // Predicated region
    $region6: #{tpu_custom_call.1} parent=1 // pred_check
      _
    $region7: #{tpu_custom_call.1} parent=1 // pred_check_branch
      %34 = sbr.rel (0) target = $region9
    $region8: #{tpu_custom_call.1} parent=1 // pred_region
      _
    $region9: #{tpu_custom_call.1} parent=1 // pred_fallthru
      _
    // Predicated region
    $region10: #{tpu_custom_call.1} parent=1 // pred_check
      _
    $region11: #{tpu_custom_call.1} parent=1 // pred_check_branch
      %36 = sbr.rel (0) target = $region13
    $region12: #{tpu_custom_call.1} parent=1 // pred_region
      %s38 = ssub.s32 8192, 8192
      %39 = vsyncadd [#allocation6], %s38
      %s40 = sshll.u32 [#allocation5], 4
      %s41 = int_to_ptr.vmem [resolvable:$true] %s40
      %46 = dma.hbm_to_vmem [thread:$0]  %s2, 8192, %s41, [#allocation6], 512, 512, 32
    $region13: #{tpu_custom_call.1} parent=1 // pred_fallthru
      _
    // Predicated region
    $region14: #{tpu_custom_call.1} parent=1 // pred_check
      _
    $region15: #{tpu_custom_call.1} parent=1 // pred_check_branch
      %48 = sbr.rel (0) target = $region17
    $region16: #{tpu_custom_call.1} parent=1 // pred_region
      _
    $region17: #{tpu_custom_call.1} parent=1 // pred_fallthru
      _
    // Predicated region
    $region18: #{tpu_custom_call.1} parent=1 // pred_check
      _
    $region19: #{tpu_custom_call.1} parent=1 // pred_check_branch
      %50 = sbr.rel (0) target = $region21
    $region20: #{tpu_custom_call.1} parent=1 // pred_region
      %s52 = ssub.s32 128, 128
      %53 = vsyncadd [#allocation6], %s52
      %s55 = sshll.u32 [#allocation7], 4
      %s56 = int_to_ptr.vmem [resolvable:$true] %s55
      %58 = dma.hbm_to_vmem [thread:$0]  %s4, 128, %s56, [#allocation6]
    $region21: #{tpu_custom_call.1} parent=1 // pred_fallthru
      _
    // Predicated region
    $region22: #{tpu_custom_call.1} parent=1 // pred_check
      _
    $region23: #{tpu_custom_call.1} parent=1 // pred_check_branch
      %60 = sbr.rel (0) target = $region25
    $region24: #{tpu_custom_call.1} parent=1 // pred_region
      %s62 = ssub.s32 128, 128
      %63 = vsyncadd [#allocation9], %s62
      %s65 = sshll.u32 [#allocation8], 4
      %s66 = int_to_ptr.vmem [resolvable:$true] %s65
      %68 = dma.hbm_to_vmem [thread:$0]  %s5, 128, %s66, [#allocation9]
    $region25: #{tpu_custom_call.1} parent=1 // pred_fallthru
      _
    // Predicated region
    $region26: #{tpu_custom_call.1} parent=1 // pred_check
      _
    $region27: #{tpu_custom_call.1} parent=1 // pred_check_branch
      %70 = sbr.rel (0) target = $region29
    $region28: #{tpu_custom_call.1} parent=1 // pred_region
      %s72 = ssub.s32 2048, 2048
      %73 = vsyncadd [#allocation9], %s72
      %s74 = sshll.u32 [#allocation10], 4
      %s75 = int_to_ptr.vmem [resolvable:$true] %s74
      %80 = dma.hbm_to_vmem [thread:$0]  %s6, 2048, %s75, [#allocation9], 128, 128, 8
    $region29: #{tpu_custom_call.1} parent=1 // pred_fallthru
      _
    // Predicated region
    $region30: #{tpu_custom_call.1} parent=1 // pred_check
      _
    $region31: #{tpu_custom_call.1} parent=1 // pred_check_branch
      %82 = sbr.rel (0) target = $region33
    $region32: #{tpu_custom_call.1} parent=1 // pred_region
      _
    $region33: #{tpu_custom_call.1} parent=1 // pred_fallthru
      _
    // Predicated region
    $region34: #{tpu_custom_call.1} parent=1 // pred_check
      _
    $region35: #{tpu_custom_call.1} parent=1 // pred_check_branch
      %84 = sbr.rel (0) target = $region37
    $region36: #{tpu_custom_call.1} parent=1 // pred_region
      %85 = dma.done [#allocation3], 1024
    $region37: #{tpu_custom_call.1} parent=1 // pred_fallthru
      _
    // Predicated region
    $region38: #{tpu_custom_call.1} parent=1 // pred_check
      _
    $region39: #{tpu_custom_call.1} parent=1 // pred_check_branch
      %87 = sbr.rel (0) target = $region41
    $region40: #{tpu_custom_call.1} parent=1 // pred_region
      %88 = dma.done [#allocation6], 8192
    $region41: #{tpu_custom_call.1} parent=1 // pred_fallthru
      _
    // Predicated region
    $region42: #{tpu_custom_call.1} parent=1 // pred_check
      _
    $region43: #{tpu_custom_call.1} parent=1 // pred_check_branch
      %90 = sbr.rel (0) target = $region45
    $region44: #{tpu_custom_call.1} parent=1 // pred_region
      %91 = dma.done [#allocation6], 128
    $region45: #{tpu_custom_call.1} parent=1 // pred_fallthru
      _
    // Predicated region
    $region46: #{tpu_custom_call.1} parent=1 // pred_check
      _
    $region47: #{tpu_custom_call.1} parent=1 // pred_check_branch
      %93 = sbr.rel (0) target = $region49
    $region48: #{tpu_custom_call.1} parent=1 // pred_region
      %94 = dma.done [#allocation9], 128
    $region49: #{tpu_custom_call.1} parent=1 // pred_fallthru
      _
    // Predicated region
    $region50: #{tpu_custom_call.1} parent=1 // pred_check
      _
    $region51: #{tpu_custom_call.1} parent=1 // pred_check_branch
      %96 = sbr.rel (0) target = $region53
    $region52: #{tpu_custom_call.1} parent=1 // pred_region
      %97 = dma.done [#allocation9], 2048
    $region53: #{tpu_custom_call.1} parent=1 // pred_fallthru
      _
    %v98 = vld [vmem:[#allocation2] sm:$0xff]
    %v99 = vld [vmem:[#allocation2 + $0x8] sm:$0xff]
    %v100 = vld [vmem:[#allocation2 + $0x10] sm:$0xff]
    %v101 = vld [vmem:[#allocation2 + $0x18] sm:$0xff]
    %v102 = vld [vmem:[#allocation2 + $0x20] sm:$0xff]
    %v103 = vld [vmem:[#allocation2 + $0x28] sm:$0xff]
    %v104 = vld [vmem:[#allocation2 + $0x30] sm:$0xff]
    %v105 = vld [vmem:[#allocation2 + $0x38] sm:$0xff]
    %v106 = vld [vmem:[%s1] sm:$0xff]
    %v107 = vld [vmem:[%s1 + $0x8] sm:$0xff]
    %v108 = vld [vmem:[%s1 + $0x10] sm:$0xff]
    %v109 = vld [vmem:[%s1 + $0x18] sm:$0xff]
    %v110 = vld [vmem:[%s3] sm:$0xf]
    %v112 = vlaneseq
    %v113 = vshrl.u32 %v112, 7
    %v114 = vsub.s32 0, %v113
    %v115 = vrot.slane %v110, %v114
    %v116 = vlaneseq
    %v117 = vshrl.u32 %v116, 7
    %v118 = vsub.s32 1, %v117
    %v119 = vrot.slane %v110, %v118
    %v120 = vlaneseq
    %v121 = vshrl.u32 %v120, 7
    %v122 = vsub.s32 2, %v121
    %v123 = vrot.slane %v110, %v122
    %v124 = vlaneseq
    %v125 = vshrl.u32 %v124, 7
    %v126 = vsub.s32 3, %v125
    %v127 = vrot.slane %v110, %v126
    %vm132 = vcmask 64512
    %v134 = vsel %vm132, %v98, 0
    %v137 = vsel %vm132, %v99, 0
    %v140 = vsel %vm132, %v100, 0
    %v143 = vsel %vm132, %v101, 0
    %v146 = vsel %vm132, %v102, 0
    %v149 = vsel %vm132, %v103, 0
    %v152 = vsel %vm132, %v104, 0
    %v155 = vsel %vm132, %v105, 0
    %157 = vmatprep.subr.mxu0 %v107
    %158 = vmatpush1.msra.mxu0 %v106
    %159 = vmatprep.subr.mxu0 0.0
    %160 = vmatpush1.msra.mxu0 0.0
    %161 = vmatprep.subr.mxu0 0.0
    %162 = vmatpush1.msra.mxu0 0.0
    %163 = vmatprep.subr.mxu0 0.0
    %164 = vmatpush1.msra.mxu0 0.0
    %165 = vmatprep.subr.mxu0 0.0
    %166 = vmatpush1.msra.mxu0 0.0
    %167 = vmatprep.subr.mxu0 0.0
    %168 = vmatpush1.msra.mxu0 0.0
    %169 = vmatprep.subr.mxu0 0.0
    %170 = vmatpush1.msra.mxu0 0.0
    %171 = vmatprep.subr.mxu0 0.0
    %172 = vmatpush1.msra.mxu0 0.0
    %173 = vmatprep.subr.mxu0 0.0
    %174 = vmatpush1.msra.mxu0 0.0
    %175 = vmatprep.subr.mxu0 0.0
    %176 = vmatpush1.msra.mxu0 0.0
    %177 = vmatprep.subr.mxu0 0.0
    %178 = vmatpush1.msra.mxu0 0.0
    %179 = vmatprep.subr.mxu0 0.0
    %180 = vmatpush1.msra.mxu0 0.0
    %181 = vmatprep.subr.mxu0 0.0
    %182 = vmatpush1.msra.mxu0 0.0
    %183 = vmatprep.subr.mxu0 0.0
    %184 = vmatpush1.msra.mxu0 0.0
    %185 = vmatprep.subr.mxu0 0.0
    %186 = vmatpush1.msra.mxu0 0.0
    %187 = vmatprep.subr.mxu0 0.0
    %188 = vmatpush1.msra.mxu0 0.0
    %189 = vmatprep.subr.mxu0 0.0
    %190 = vmatpush1.msra.mxu0 0.0
    %191 = vmatprep.subr.mxu0 0.0
    %192 = vmatpush1.msra.mxu0 0.0
    %193 = vmatprep.subr.mxu0 0.0
    %194 = vmatpush1.msra.mxu0 0.0
    %195 = vmatprep.subr.mxu0 0.0
    %196 = vmatpush1.msra.mxu0 0.0
    %197 = vmatprep.subr.mxu0 0.0
    %198 = vmatpush1.msra.mxu0 0.0
    %199 = vmatprep.subr.mxu0 0.0
    %200 = vmatpush1.msra.mxu0 0.0
    %201 = vmatprep.subr.mxu0 0.0
    %202 = vmatpush1.msra.mxu0 0.0
    %203 = vmatprep.subr.mxu0 0.0
    %204 = vmatpush1.msra.mxu0 0.0
    %205 = vmatprep.subr.mxu0 0.0
    %206 = vmatpush1.msra.mxu0 0.0
    %207 = vmatprep.subr.mxu0 0.0
    %208 = vmatpush1.msra.mxu0 0.0
    %209 = vmatprep.subr.mxu0 0.0
    %210 = vmatpush1.msra.mxu0 0.0
    %211 = vmatprep.subr.mxu0 0.0
    %212 = vmatpush1.msra.mxu0 0.0
    %213 = vmatprep.subr.mxu0 0.0
    %214 = vmatpush1.msra.mxu0 0.0
    %215 = vmatprep.subr.mxu0 0.0
    %216 = vmatpush1.msra.mxu0 0.0
    %217 = vmatprep.subr.mxu0 0.0
    %218 = vmatpush1.msra.mxu0 0.0
    %219 = vmatprep.subr.mxu0 0.0
    %220 = vmatpush1.msra.mxu0 0.0
    %221 = vmatprep.mubr.f32.mxu0 0.0
    %222 = vmatmul.mubr.f32.gmra.mrb[0].mxu0 %v134
    %v223 = vpop.f32.mrb[0].mxu0
    %v224 = vadd.f32 %v115, %v223
    %v225 = vpop.f32.mrb[0].mxu0
    %v226 = vadd.f32 %v119, %v225
    %227 = vmatprep.mubr.f32.mxu0 0.0
    %228 = vmatmul.mubr.f32.gmra.mrb[0].mxu0 %v137
    %v229 = vpop.f32.mrb[0].mxu0
    %v230 = vadd.f32 %v115, %v229
    %v231 = vpop.f32.mrb[0].mxu0
    %v232 = vadd.f32 %v119, %v231
    %233 = vmatprep.mubr.f32.mxu0 0.0
    %234 = vmatmul.mubr.f32.gmra.mrb[0].mxu0 %v140
    %v235 = vpop.f32.mrb[0].mxu0
    %v236 = vadd.f32 %v115, %v235
    %v237 = vpop.f32.mrb[0].mxu0
    %v238 = vadd.f32 %v119, %v237
    %239 = vmatprep.mubr.f32.mxu0 0.0
    %240 = vmatmul.mubr.f32.gmra.mrb[0].mxu0 %v143
    %v241 = vpop.f32.mrb[0].mxu0
    %v242 = vadd.f32 %v115, %v241
    %v243 = vpop.f32.mrb[0].mxu0
    %v244 = vadd.f32 %v119, %v243
    %245 = vmatprep.mubr.f32.mxu0 0.0
    %246 = vmatmul.mubr.f32.gmra.mrb[0].mxu0 %v146
    %v247 = vpop.f32.mrb[0].mxu0
    %v248 = vadd.f32 %v115, %v247
    %v249 = vpop.f32.mrb[0].mxu0
    %v250 = vadd.f32 %v119, %v249
    %251 = vmatprep.mubr.f32.mxu0 0.0
    %252 = vmatmul.mubr.f32.gmra.mrb[0].mxu0 %v149
    %v253 = vpop.f32.mrb[0].mxu0
    %v254 = vadd.f32 %v115, %v253
    %v255 = vpop.f32.mrb[0].mxu0
    %v256 = vadd.f32 %v119, %v255
    %257 = vmatprep.mubr.f32.mxu0 0.0
    %258 = vmatmul.mubr.f32.gmra.mrb[0].mxu0 %v152
    %v259 = vpop.f32.mrb[0].mxu0
    %v260 = vadd.f32 %v115, %v259
    %v261 = vpop.f32.mrb[0].mxu0
    %v262 = vadd.f32 %v119, %v261
    %263 = vmatprep.mubr.f32.mxu0 0.0
    %264 = vmatmul.mubr.f32.gmra.mrb[0].mxu0 %v155
    %v265 = vpop.f32.mrb[0].mxu0
    %v266 = vadd.f32 %v115, %v265
    %v267 = vpop.f32.mrb[0].mxu0
    %v268 = vadd.f32 %v119, %v267
    %269 = vdwg.mxu0
    %270 = vmatprep.subr.mxu0 %v109
    %271 = vmatpush1.msra.mxu0 %v108
    %272 = vmatprep.subr.mxu0 0.0
    %273 = vmatpush1.msra.mxu0 0.0
    %274 = vmatprep.subr.mxu0 0.0
    %275 = vmatpush1.msra.mxu0 0.0
    %276 = vmatprep.subr.mxu0 0.0
    %277 = vmatpush1.msra.mxu0 0.0
    %278 = vmatprep.subr.mxu0 0.0
    %279 = vmatpush1.msra.mxu0 0.0
    %280 = vmatprep.subr.mxu0 0.0
    %281 = vmatpush1.msra.mxu0 0.0
    %282 = vmatprep.subr.mxu0 0.0
    %283 = vmatpush1.msra.mxu0 0.0
    %284 = vmatprep.subr.mxu0 0.0
    %285 = vmatpush1.msra.mxu0 0.0
    %286 = vmatprep.subr.mxu0 0.0
    %287 = vmatpush1.msra.mxu0 0.0
    %288 = vmatprep.subr.mxu0 0.0
    %289 = vmatpush1.msra.mxu0 0.0
    %290 = vmatprep.subr.mxu0 0.0
    %291 = vmatpush1.msra.mxu0 0.0
    %292 = vmatprep.subr.mxu0 0.0
    %293 = vmatpush1.msra.mxu0 0.0
    %294 = vmatprep.subr.mxu0 0.0
    %295 = vmatpush1.msra.mxu0 0.0
    %296 = vmatprep.subr.mxu0 0.0
    %297 = vmatpush1.msra.mxu0 0.0
    %298 = vmatprep.subr.mxu0 0.0
    %299 = vmatpush1.msra.mxu0 0.0
    %300 = vmatprep.subr.mxu0 0.0
    %301 = vmatpush1.msra.mxu0 0.0
    %302 = vmatprep.subr.mxu0 0.0
    %303 = vmatpush1.msra.mxu0 0.0
    %304 = vmatprep.subr.mxu0 0.0
    %305 = vmatpush1.msra.mxu0 0.0
    %306 = vmatprep.subr.mxu0 0.0
    %307 = vmatpush1.msra.mxu0 0.0
    %308 = vmatprep.subr.mxu0 0.0
    %309 = vmatpush1.msra.mxu0 0.0
    %310 = vmatprep.subr.mxu0 0.0
    %311 = vmatpush1.msra.mxu0 0.0
    %312 = vmatprep.subr.mxu0 0.0
    %313 = vmatpush1.msra.mxu0 0.0
    %314 = vmatprep.subr.mxu0 0.0
    %315 = vmatpush1.msra.mxu0 0.0
    %316 = vmatprep.subr.mxu0 0.0
    %317 = vmatpush1.msra.mxu0 0.0
    %318 = vmatprep.subr.mxu0 0.0
    %319 = vmatpush1.msra.mxu0 0.0
    %320 = vmatprep.subr.mxu0 0.0
    %321 = vmatpush1.msra.mxu0 0.0
    %322 = vmatprep.subr.mxu0 0.0
    %323 = vmatpush1.msra.mxu0 0.0
    %324 = vmatprep.subr.mxu0 0.0
    %325 = vmatpush1.msra.mxu0 0.0
    %326 = vmatprep.subr.mxu0 0.0
    %327 = vmatpush1.msra.mxu0 0.0
    %328 = vmatprep.subr.mxu0 0.0
    %329 = vmatpush1.msra.mxu0 0.0
    %330 = vmatprep.subr.mxu0 0.0
    %331 = vmatpush1.msra.mxu0 0.0
    %332 = vmatprep.subr.mxu0 0.0
    %333 = vmatpush1.msra.mxu0 0.0
    %334 = vmatprep.mubr.f32.mxu0 0.0
    %335 = vmatmul.mubr.f32.gmra.mrb[0].mxu0 %v134
    %v336 = vpop.f32.mrb[0].mxu0
    %v337 = vadd.f32 %v123, %v336
    %v338 = vpop.f32.mrb[0].mxu0
    %v339 = vadd.f32 %v127, %v338
    %340 = vmatprep.mubr.f32.mxu0 0.0
    %341 = vmatmul.mubr.f32.gmra.mrb[0].mxu0 %v137
    %v342 = vpop.f32.mrb[0].mxu0
    %v343 = vadd.f32 %v123, %v342
    %v344 = vpop.f32.mrb[0].mxu0
    %v345 = vadd.f32 %v127, %v344
    %346 = vmatprep.mubr.f32.mxu0 0.0
    %347 = vmatmul.mubr.f32.gmra.mrb[0].mxu0 %v140
    %v348 = vpop.f32.mrb[0].mxu0
    %v349 = vadd.f32 %v123, %v348
    %v350 = vpop.f32.mrb[0].mxu0
    %v351 = vadd.f32 %v127, %v350
    %352 = vmatprep.mubr.f32.mxu0 0.0
    %353 = vmatmul.mubr.f32.gmra.mrb[0].mxu0 %v143
    %v354 = vpop.f32.mrb[0].mxu0
    %v355 = vadd.f32 %v123, %v354
    %v356 = vpop.f32.mrb[0].mxu0
    %v357 = vadd.f32 %v127, %v356
    %358 = vmatprep.mubr.f32.mxu0 0.0
    %359 = vmatmul.mubr.f32.gmra.mrb[0].mxu0 %v146
    %v360 = vpop.f32.mrb[0].mxu0
    %v361 = vadd.f32 %v123, %v360
    %v362 = vpop.f32.mrb[0].mxu0
    %v363 = vadd.f32 %v127, %v362
    %364 = vmatprep.mubr.f32.mxu0 0.0
    %365 = vmatmul.mubr.f32.gmra.mrb[0].mxu0 %v149
    %v366 = vpop.f32.mrb[0].mxu0
    %v367 = vadd.f32 %v123, %v366
    %v368 = vpop.f32.mrb[0].mxu0
    %v369 = vadd.f32 %v127, %v368
    %370 = vmatprep.mubr.f32.mxu0 0.0
    %371 = vmatmul.mubr.f32.gmra.mrb[0].mxu0 %v152
    %v372 = vpop.f32.mrb[0].mxu0
    %v373 = vadd.f32 %v123, %v372
    %v374 = vpop.f32.mrb[0].mxu0
    %v375 = vadd.f32 %v127, %v374
    %376 = vmatprep.mubr.f32.mxu0 0.0
    %377 = vmatmul.mubr.f32.gmra.mrb[0].mxu0 %v155
    %v378 = vpop.f32.mrb[0].mxu0
    %v379 = vadd.f32 %v123, %v378
    %v380 = vpop.f32.mrb[0].mxu0
    %v381 = vadd.f32 %v127, %v380
    %382 = vdwg.mxu0
    %v383 = vld [vmem:[#allocation5] sm:$0xff]
    %v384 = vld [vmem:[#allocation5 + $0x8] sm:$0xff]
    %v385 = vld [vmem:[#allocation5 + $0x10] sm:$0xff]
    %v386 = vld [vmem:[#allocation5 + $0x18] sm:$0xff]
    %v387 = vld [vmem:[#allocation5 + $0x20] sm:$0xff]
    %v388 = vld [vmem:[#allocation5 + $0x28] sm:$0xff]
    %v389 = vld [vmem:[#allocation5 + $0x30] sm:$0xff]
    %v390 = vld [vmem:[#allocation5 + $0x38] sm:$0xff]
    %v391 = vld [vmem:[#allocation5 + $0x40] sm:$0xff]
    %v392 = vld [vmem:[#allocation5 + $0x48] sm:$0xff]
    %v393 = vld [vmem:[#allocation5 + $0x50] sm:$0xff]
    %v394 = vld [vmem:[#allocation5 + $0x58] sm:$0xff]
    %v395 = vld [vmem:[#allocation5 + $0x60] sm:$0xff]
    %v396 = vld [vmem:[#allocation5 + $0x68] sm:$0xff]
    %v397 = vld [vmem:[#allocation5 + $0x70] sm:$0xff]
    %v398 = vld [vmem:[#allocation5 + $0x78] sm:$0xff]
    %v399 = vld [vmem:[#allocation5 + $0x80] sm:$0xff]
    %v400 = vld [vmem:[#allocation5 + $0x88] sm:$0xff]
    %v401 = vld [vmem:[#allocation5 + $0x90] sm:$0xff]
    %v402 = vld [vmem:[#allocation5 + $0x98] sm:$0xff]
    %v403 = vld [vmem:[#allocation5 + $0xa0] sm:$0xff]
    %v404 = vld [vmem:[#allocation5 + $0xa8] sm:$0xff]
    %v405 = vld [vmem:[#allocation5 + $0xb0] sm:$0xff]
    %v406 = vld [vmem:[#allocation5 + $0xb8] sm:$0xff]
    %v407 = vld [vmem:[#allocation5 + $0xc0] sm:$0xff]
    %v408 = vld [vmem:[#allocation5 + $0xc8] sm:$0xff]
    %v409 = vld [vmem:[#allocation5 + $0xd0] sm:$0xff]
    %v410 = vld [vmem:[#allocation5 + $0xd8] sm:$0xff]
    %v411 = vld [vmem:[#allocation5 + $0xe0] sm:$0xff]
    %v412 = vld [vmem:[#allocation5 + $0xe8] sm:$0xff]
    %v413 = vld [vmem:[#allocation5 + $0xf0] sm:$0xff]
    %v414 = vld [vmem:[#allocation5 + $0xf8] sm:$0xff]
    %v415 = vld [vmem:[#allocation5 + $0x100] sm:$0xff]
    %v416 = vld [vmem:[#allocation5 + $0x108] sm:$0xff]
    %v417 = vld [vmem:[#allocation5 + $0x110] sm:$0xff]
    %v418 = vld [vmem:[#allocation5 + $0x118] sm:$0xff]
    %v419 = vld [vmem:[#allocation5 + $0x120] sm:$0xff]
    %v420 = vld [vmem:[#allocation5 + $0x128] sm:$0xff]
    %v421 = vld [vmem:[#allocation5 + $0x130] sm:$0xff]
    %v422 = vld [vmem:[#allocation5 + $0x138] sm:$0xff]
    %v423 = vld [vmem:[#allocation5 + $0x140] sm:$0xff]
    %v424 = vld [vmem:[#allocation5 + $0x148] sm:$0xff]
    %v425 = vld [vmem:[#allocation5 + $0x150] sm:$0xff]
    %v426 = vld [vmem:[#allocation5 + $0x158] sm:$0xff]
    %v427 = vld [vmem:[#allocation5 + $0x160] sm:$0xff]
    %v428 = vld [vmem:[#allocation5 + $0x168] sm:$0xff]
    %v429 = vld [vmem:[#allocation5 + $0x170] sm:$0xff]
    %v430 = vld [vmem:[#allocation5 + $0x178] sm:$0xff]
    %v431 = vld [vmem:[#allocation5 + $0x180] sm:$0xff]
    %v432 = vld [vmem:[#allocation5 + $0x188] sm:$0xff]
    %v433 = vld [vmem:[#allocation5 + $0x190] sm:$0xff]
    %v434 = vld [vmem:[#allocation5 + $0x198] sm:$0xff]
    %v435 = vld [vmem:[#allocation5 + $0x1a0] sm:$0xff]
    %v436 = vld [vmem:[#allocation5 + $0x1a8] sm:$0xff]
    %v437 = vld [vmem:[#allocation5 + $0x1b0] sm:$0xff]
    %v438 = vld [vmem:[#allocation5 + $0x1b8] sm:$0xff]
    %v439 = vld [vmem:[#allocation5 + $0x1c0] sm:$0xff]
    %v440 = vld [vmem:[#allocation5 + $0x1c8] sm:$0xff]
    %v441 = vld [vmem:[#allocation5 + $0x1d0] sm:$0xff]
    %v442 = vld [vmem:[#allocation5 + $0x1d8] sm:$0xff]
    %v443 = vld [vmem:[#allocation5 + $0x1e0] sm:$0xff]
    %v444 = vld [vmem:[#allocation5 + $0x1e8] sm:$0xff]
    %v445 = vld [vmem:[#allocation5 + $0x1f0] sm:$0xff]
    %v446 = vld [vmem:[#allocation5 + $0x1f8] sm:$0xff]
    %v447 = vld [vmem:[#allocation7] sm:$0xff]
    %v448 = vld [vmem:[#allocation8] sm:$0xff]
    %449 = vmatprep.subr.mxu0 %v384
    %450 = vmatpush1.msra.mxu0 %v383
    %451 = vmatprep.subr.mxu0 %v388
    %452 = vmatpush1.msra.mxu0 %v387
    %453 = vmatprep.subr.mxu0 %v392
    %454 = vmatpush1.msra.mxu0 %v391
    %455 = vmatprep.subr.mxu0 %v396
    %456 = vmatpush1.msra.mxu0 %v395
    %457 = vmatprep.subr.mxu0 %v400
    %458 = vmatpush1.msra.mxu0 %v399
    %459 = vmatprep.subr.mxu0 %v404
    %460 = vmatpush1.msra.mxu0 %v403
    %461 = vmatprep.subr.mxu0 %v408
    %462 = vmatpush1.msra.mxu0 %v407
    %463 = vmatprep.subr.mxu0 %v412
    %464 = vmatpush1.msra.mxu0 %v411
    %465 = vmatprep.subr.mxu0 %v416
    %466 = vmatpush1.msra.mxu0 %v415
    %467 = vmatprep.subr.mxu0 %v420
    %468 = vmatpush1.msra.mxu0 %v419
    %469 = vmatprep.subr.mxu0 %v424
    %470 = vmatpush1.msra.mxu0 %v423
    %471 = vmatprep.subr.mxu0 %v428
    %472 = vmatpush1.msra.mxu0 %v427
    %473 = vmatprep.subr.mxu0 %v432
    %474 = vmatpush1.msra.mxu0 %v431
    %475 = vmatprep.subr.mxu0 %v436
    %476 = vmatpush1.msra.mxu0 %v435
    %477 = vmatprep.subr.mxu0 %v440
    %478 = vmatpush1.msra.mxu0 %v439
    %479 = vmatprep.subr.mxu0 %v444
    %480 = vmatpush1.msra.mxu0 %v443
    %481 = vmatprep.subr.mxu0 0.0
    %482 = vmatpush1.msra.mxu0 0.0
    %483 = vmatprep.subr.mxu0 0.0
    %484 = vmatpush1.msra.mxu0 0.0
    %485 = vmatprep.subr.mxu0 0.0
    %486 = vmatpush1.msra.mxu0 0.0
    %487 = vmatprep.subr.mxu0 0.0
    %488 = vmatpush1.msra.mxu0 0.0
    %489 = vmatprep.subr.mxu0 0.0
    %490 = vmatpush1.msra.mxu0 0.0
    %491 = vmatprep.subr.mxu0 0.0
    %492 = vmatpush1.msra.mxu0 0.0
    %493 = vmatprep.subr.mxu0 0.0
    %494 = vmatpush1.msra.mxu0 0.0
    %495 = vmatprep.subr.mxu0 0.0
    %496 = vmatpush1.msra.mxu0 0.0
    %497 = vmatprep.subr.mxu0 0.0
    %498 = vmatpush1.msra.mxu0 0.0
    %499 = vmatprep.subr.mxu0 0.0
    %500 = vmatpush1.msra.mxu0 0.0
    %501 = vmatprep.subr.mxu0 0.0
    %502 = vmatpush1.msra.mxu0 0.0
    %503 = vmatprep.subr.mxu0 0.0
    %504 = vmatpush1.msra.mxu0 0.0
    %505 = vmatprep.subr.mxu0 0.0
    %506 = vmatpush1.msra.mxu0 0.0
    %507 = vmatprep.subr.mxu0 0.0
    %508 = vmatpush1.msra.mxu0 0.0
    %509 = vmatprep.subr.mxu0 0.0
    %510 = vmatpush1.msra.mxu0 0.0
    %511 = vmatprep.subr.mxu0 0.0
    %512 = vmatpush1.msra.mxu0 0.0
    %513 = vmatprep.mubr.f32.mxu0 0.0
    %514 = vmatmul.mubr.f32.gmra.mrb[0].mxu0 %v447
    %v515 = vpop.f32.mrb[0].mxu0
    %v516 = vadd.f32 0.0, %v515
    %v517 = vpop.f32.mrb[0].mxu0
    %v518 = vadd.f32 0.0, %v517
    %519 = vdwg.mxu0
    %520 = vmatprep.subr.mxu0 %v386
    %521 = vmatpush1.msra.mxu0 %v385
    %522 = vmatprep.subr.mxu0 %v390
    %523 = vmatpush1.msra.mxu0 %v389
    %524 = vmatprep.subr.mxu0 %v394
    %525 = vmatpush1.msra.mxu0 %v393
    %526 = vmatprep.subr.mxu0 %v398
    %527 = vmatpush1.msra.mxu0 %v397
    %528 = vmatprep.subr.mxu0 %v402
    %529 = vmatpush1.msra.mxu0 %v401
    %530 = vmatprep.subr.mxu0 %v406
    %531 = vmatpush1.msra.mxu0 %v405
    %532 = vmatprep.subr.mxu0 %v410
    %533 = vmatpush1.msra.mxu0 %v409
    %534 = vmatprep.subr.mxu0 %v414
    %535 = vmatpush1.msra.mxu0 %v413
    %536 = vmatprep.subr.mxu0 %v418
    %537 = vmatpush1.msra.mxu0 %v417
    %538 = vmatprep.subr.mxu0 %v422
    %539 = vmatpush1.msra.mxu0 %v421
    %540 = vmatprep.subr.mxu0 %v426
    %541 = vmatpush1.msra.mxu0 %v425
    %542 = vmatprep.subr.mxu0 %v430
    %543 = vmatpush1.msra.mxu0 %v429
    %544 = vmatprep.subr.mxu0 %v434
    %545 = vmatpush1.msra.mxu0 %v433
    %546 = vmatprep.subr.mxu0 %v438
    %547 = vmatpush1.msra.mxu0 %v437
    %548 = vmatprep.subr.mxu0 %v442
    %549 = vmatpush1.msra.mxu0 %v441
    %550 = vmatprep.subr.mxu0 %v446
    %551 = vmatpush1.msra.mxu0 %v445
    %552 = vmatprep.subr.mxu0 0.0
    %553 = vmatpush1.msra.mxu0 0.0
    %554 = vmatprep.subr.mxu0 0.0
    %555 = vmatpush1.msra.mxu0 0.0
    %556 = vmatprep.subr.mxu0 0.0
    %557 = vmatpush1.msra.mxu0 0.0
    %558 = vmatprep.subr.mxu0 0.0
    %559 = vmatpush1.msra.mxu0 0.0
    %560 = vmatprep.subr.mxu0 0.0
    %561 = vmatpush1.msra.mxu0 0.0
    %562 = vmatprep.subr.mxu0 0.0
    %563 = vmatpush1.msra.mxu0 0.0
    %564 = vmatprep.subr.mxu0 0.0
    %565 = vmatpush1.msra.mxu0 0.0
    %566 = vmatprep.subr.mxu0 0.0
    %567 = vmatpush1.msra.mxu0 0.0
    %568 = vmatprep.subr.mxu0 0.0
    %569 = vmatpush1.msra.mxu0 0.0
    %570 = vmatprep.subr.mxu0 0.0
    %571 = vmatpush1.msra.mxu0 0.0
    %572 = vmatprep.subr.mxu0 0.0
    %573 = vmatpush1.msra.mxu0 0.0
    %574 = vmatprep.subr.mxu0 0.0
    %575 = vmatpush1.msra.mxu0 0.0
    %576 = vmatprep.subr.mxu0 0.0
    %577 = vmatpush1.msra.mxu0 0.0
    %578 = vmatprep.subr.mxu0 0.0
    %579 = vmatpush1.msra.mxu0 0.0
    %580 = vmatprep.subr.mxu0 0.0
    %581 = vmatpush1.msra.mxu0 0.0
    %582 = vmatprep.subr.mxu0 0.0
    %583 = vmatpush1.msra.mxu0 0.0
    %584 = vmatprep.mubr.f32.mxu0 0.0
    %585 = vmatmul.mubr.f32.gmra.mrb[0].mxu0 %v447
    %v586 = vpop.f32.mrb[0].mxu0
    %v587 = vadd.f32 0.0, %v586
    %v588 = vpop.f32.mrb[0].mxu0
    %v589 = vadd.f32 0.0, %v588
    %590 = vdwg.mxu0
    %v591 = vadd.f32 %v224, %v516
    %v592 = vadd.f32 %v226, %v518
    %v593 = vadd.f32 %v337, %v587
    %v594 = vadd.f32 %v339, %v589
    %v595 = vxor.u32 %v591, 2147483648
    %v596 = vxor.u32 %v592, 2147483648
    %v597 = vxor.u32 %v594, 2147483648
    %v598 = vmul.f32 %v595, 1.442695
    %v599 = vpow.pop %v598
    %v600 = vmul.f32 %v596, 1.442695
    %v601 = vpow.pop %v600
    %v602 = vmul.f32 %v597, 1.442695
    %v603 = vpow.pop %v602
    %v604 = vadd.f32 %v599, 1.0
    %v605 = vadd.f32 %v601, 1.0
    %v606 = vadd.f32 %v603, 1.0
    %v607 = vrcp.pop %v604
    %v608 = vmul.f32 1.0, %v607
    %v609 = vrcp.pop %v605
    %v610 = vmul.f32 1.0, %v609
    %v611 = vrcp.pop %v606
    %v612 = vmul.f32 1.0, %v611
    %v613 = vtanh.pop %v593
    %v614 = vmul.f32 %v610, %v448
    %v615 = vmul.f32 %v608, %v613
    %v616 = vadd.f32 %v614, %v615
    %v617 = vtanh.pop %v616
    %v618 = vmul.f32 %v612, %v617
    %619 = vmatprep.subr.mxu0 %v384
    %620 = vmatpush1.msra.mxu0 %v383
    %621 = vmatprep.subr.mxu0 %v388
    %622 = vmatpush1.msra.mxu0 %v387
    %623 = vmatprep.subr.mxu0 %v392
    %624 = vmatpush1.msra.mxu0 %v391
    %625 = vmatprep.subr.mxu0 %v396
    %626 = vmatpush1.msra.mxu0 %v395
    %627 = vmatprep.subr.mxu0 %v400
    %628 = vmatpush1.msra.mxu0 %v399
    %629 = vmatprep.subr.mxu0 %v404
    %630 = vmatpush1.msra.mxu0 %v403
    %631 = vmatprep.subr.mxu0 %v408
    %632 = vmatpush1.msra.mxu0 %v407
    %633 = vmatprep.subr.mxu0 %v412
    %634 = vmatpush1.msra.mxu0 %v411
    %635 = vmatprep.subr.mxu0 %v416
    %636 = vmatpush1.msra.mxu0 %v415
    %637 = vmatprep.subr.mxu0 %v420
    %638 = vmatpush1.msra.mxu0 %v419
    %639 = vmatprep.subr.mxu0 %v424
    %640 = vmatpush1.msra.mxu0 %v423
    %641 = vmatprep.subr.mxu0 %v428
    %642 = vmatpush1.msra.mxu0 %v427
    %643 = vmatprep.subr.mxu0 %v432
    %644 = vmatpush1.msra.mxu0 %v431
    %645 = vmatprep.subr.mxu0 %v436
    %646 = vmatpush1.msra.mxu0 %v435
    %647 = vmatprep.subr.mxu0 %v440
    %648 = vmatpush1.msra.mxu0 %v439
    %649 = vmatprep.subr.mxu0 %v444
    %650 = vmatpush1.msra.mxu0 %v443
    %651 = vmatprep.subr.mxu0 0.0
    %652 = vmatpush1.msra.mxu0 0.0
    %653 = vmatprep.subr.mxu0 0.0
    %654 = vmatpush1.msra.mxu0 0.0
    %655 = vmatprep.subr.mxu0 0.0
    %656 = vmatpush1.msra.mxu0 0.0
    %657 = vmatprep.subr.mxu0 0.0
    %658 = vmatpush1.msra.mxu0 0.0
    %659 = vmatprep.subr.mxu0 0.0
    %660 = vmatpush1.msra.mxu0 0.0
    %661 = vmatprep.subr.mxu0 0.0
    %662 = vmatpush1.msra.mxu0 0.0
    %663 = vmatprep.subr.mxu0 0.0
    %664 = vmatpush1.msra.mxu0 0.0
    %665 = vmatprep.subr.mxu0 0.0
    %666 = vmatpush1.msra.mxu0 0.0
    %667 = vmatprep.subr.mxu0 0.0
    %668 = vmatpush1.msra.mxu0 0.0
    %669 = vmatprep.subr.mxu0 0.0
    %670 = vmatpush1.msra.mxu0 0.0
    %671 = vmatprep.subr.mxu0 0.0
    %672 = vmatpush1.msra.mxu0 0.0
    %673 = vmatprep.subr.mxu0 0.0
    %674 = vmatpush1.msra.mxu0 0.0
    %675 = vmatprep.subr.mxu0 0.0
    %676 = vmatpush1.msra.mxu0 0.0
    %677 = vmatprep.subr.mxu0 0.0
    %678 = vmatpush1.msra.mxu0 0.0
    %679 = vmatprep.subr.mxu0 0.0
    %680 = vmatpush1.msra.mxu0 0.0
    %681 = vmatprep.subr.mxu0 0.0
    %682 = vmatpush1.msra.mxu0 0.0
    %683 = vmatprep.mubr.f32.mxu0 0.0
    %684 = vmatmul.mubr.f32.gmra.mrb[0].mxu0 %v618
    %v685 = vpop.f32.mrb[0].mxu0
    %v686 = vadd.f32 0.0, %v685
    %v687 = vpop.f32.mrb[0].mxu0
    %v688 = vadd.f32 0.0, %v687
    %689 = vdwg.mxu0
    %690 = vmatprep.subr.mxu0 %v386
    %691 = vmatpush1.msra.mxu0 %v385
    %692 = vmatprep.subr.mxu0 %v390
    %693 = vmatpush1.msra.mxu0 %v389
    %694 = vmatprep.subr.mxu0 %v394
    %695 = vmatpush1.msra.mxu0 %v393
    %696 = vmatprep.subr.mxu0 %v398
    %697 = vmatpush1.msra.mxu0 %v397
    %698 = vmatprep.subr.mxu0 %v402
    %699 = vmatpush1.msra.mxu0 %v401
    %700 = vmatprep.subr.mxu0 %v406
    %701 = vmatpush1.msra.mxu0 %v405
    %702 = vmatprep.subr.mxu0 %v410
    %703 = vmatpush1.msra.mxu0 %v409
    %704 = vmatprep.subr.mxu0 %v414
    %705 = vmatpush1.msra.mxu0 %v413
    %706 = vmatprep.subr.mxu0 %v418
    %707 = vmatpush1.msra.mxu0 %v417
    %708 = vmatprep.subr.mxu0 %v422
    %709 = vmatpush1.msra.mxu0 %v421
    %710 = vmatprep.subr.mxu0 %v426
    %711 = vmatpush1.msra.mxu0 %v425
    %712 = vmatprep.subr.mxu0 %v430
    %713 = vmatpush1.msra.mxu0 %v429
    %714 = vmatprep.subr.mxu0 %v434
    %715 = vmatpush1.msra.mxu0 %v433
    %716 = vmatprep.subr.mxu0 %v438
    %717 = vmatpush1.msra.mxu0 %v437
    %718 = vmatprep.subr.mxu0 %v442
    %719 = vmatpush1.msra.mxu0 %v441
    %720 = vmatprep.subr.mxu0 %v446
    %721 = vmatpush1.msra.mxu0 %v445
    %722 = vmatprep.subr.mxu0 0.0
    %723 = vmatpush1.msra.mxu0 0.0
    %724 = vmatprep.subr.mxu0 0.0
    %725 = vmatpush1.msra.mxu0 0.0
    %726 = vmatprep.subr.mxu0 0.0
    %727 = vmatpush1.msra.mxu0 0.0
    %728 = vmatprep.subr.mxu0 0.0
    %729 = vmatpush1.msra.mxu0 0.0
    %730 = vmatprep.subr.mxu0 0.0
    %731 = vmatpush1.msra.mxu0 0.0
    %732 = vmatprep.subr.mxu0 0.0
    %733 = vmatpush1.msra.mxu0 0.0
    %734 = vmatprep.subr.mxu0 0.0
    %735 = vmatpush1.msra.mxu0 0.0
    %736 = vmatprep.subr.mxu0 0.0
    %737 = vmatpush1.msra.mxu0 0.0
    %738 = vmatprep.subr.mxu0 0.0
    %739 = vmatpush1.msra.mxu0 0.0
    %740 = vmatprep.subr.mxu0 0.0
    %741 = vmatpush1.msra.mxu0 0.0
    %742 = vmatprep.subr.mxu0 0.0
    %743 = vmatpush1.msra.mxu0 0.0
    %744 = vmatprep.subr.mxu0 0.0
    %745 = vmatpush1.msra.mxu0 0.0
    %746 = vmatprep.subr.mxu0 0.0
    %747 = vmatpush1.msra.mxu0 0.0
    %748 = vmatprep.subr.mxu0 0.0
    %749 = vmatpush1.msra.mxu0 0.0
    %750 = vmatprep.subr.mxu0 0.0
    %751 = vmatpush1.msra.mxu0 0.0
    %752 = vmatprep.subr.mxu0 0.0
    %753 = vmatpush1.msra.mxu0 0.0
    %754 = vmatprep.mubr.f32.mxu0 0.0
    %755 = vmatmul.mubr.f32.gmra.mrb[0].mxu0 %v618
    %v756 = vpop.f32.mrb[0].mxu0
    %v757 = vadd.f32 0.0, %v756
    %v758 = vpop.f32.mrb[0].mxu0
    %v759 = vadd.f32 0.0, %v758
    %760 = vdwg.mxu0
    %v761 = vadd.f32 %v230, %v686
    %v762 = vadd.f32 %v232, %v688
    %v763 = vadd.f32 %v343, %v757
    %v764 = vadd.f32 %v345, %v759
    %v765 = vxor.u32 %v761, 2147483648
    %v766 = vxor.u32 %v762, 2147483648
    %v767 = vxor.u32 %v764, 2147483648
    %v768 = vmul.f32 %v765, 1.442695
    %v769 = vpow.pop %v768
    %v770 = vmul.f32 %v766, 1.442695
    %v771 = vpow.pop %v770
    %v772 = vmul.f32 %v767, 1.442695
    %v773 = vpow.pop %v772
    %v774 = vadd.f32 %v769, 1.0
    %v775 = vadd.f32 %v771, 1.0
    %v776 = vadd.f32 %v773, 1.0
    %v777 = vrcp.pop %v774
    %v778 = vmul.f32 1.0, %v777
    %v779 = vrcp.pop %v775
    %v780 = vmul.f32 1.0, %v779
    %v781 = vrcp.pop %v776
    %v782 = vmul.f32 1.0, %v781
    %v783 = vtanh.pop %v763
    %v784 = vmul.f32 %v780, %v616
    %v785 = vmul.f32 %v778, %v783
    %v786 = vadd.f32 %v784, %v785
    %v787 = vtanh.pop %v786
    %v788 = vmul.f32 %v782, %v787
    %789 = vmatprep.subr.mxu0 %v384
    %790 = vmatpush1.msra.mxu0 %v383
    %791 = vmatprep.subr.mxu0 %v388
    %792 = vmatpush1.msra.mxu0 %v387
    %793 = vmatprep.subr.mxu0 %v392
    %794 = vmatpush1.msra.mxu0 %v391
    %795 = vmatprep.subr.mxu0 %v396
    %796 = vmatpush1.msra.mxu0 %v395
    %797 = vmatprep.subr.mxu0 %v400
    %798 = vmatpush1.msra.mxu0 %v399
    %799 = vmatprep.subr.mxu0 %v404
    %800 = vmatpush1.msra.mxu0 %v403
    %801 = vmatprep.subr.mxu0 %v408
    %802 = vmatpush1.msra.mxu0 %v407
    %803 = vmatprep.subr.mxu0 %v412
    %804 = vmatpush1.msra.mxu0 %v411
    %805 = vmatprep.subr.mxu0 %v416
    %806 = vmatpush1.msra.mxu0 %v415
    %807 = vmatprep.subr.mxu0 %v420
    %808 = vmatpush1.msra.mxu0 %v419
    %809 = vmatprep.subr.mxu0 %v424
    %810 = vmatpush1.msra.mxu0 %v423
    %811 = vmatprep.subr.mxu0 %v428
    %812 = vmatpush1.msra.mxu0 %v427
    %813 = vmatprep.subr.mxu0 %v432
    %814 = vmatpush1.msra.mxu0 %v431
    %815 = vmatprep.subr.mxu0 %v436
    %816 = vmatpush1.msra.mxu0 %v435
    %817 = vmatprep.subr.mxu0 %v440
    %818 = vmatpush1.msra.mxu0 %v439
    %819 = vmatprep.subr.mxu0 %v444
    %820 = vmatpush1.msra.mxu0 %v443
    %821 = vmatprep.subr.mxu0 0.0
    %822 = vmatpush1.msra.mxu0 0.0
    %823 = vmatprep.subr.mxu0 0.0
    %824 = vmatpush1.msra.mxu0 0.0
    %825 = vmatprep.subr.mxu0 0.0
    %826 = vmatpush1.msra.mxu0 0.0
    %827 = vmatprep.subr.mxu0 0.0
    %828 = vmatpush1.msra.mxu0 0.0
    %829 = vmatprep.subr.mxu0 0.0
    %830 = vmatpush1.msra.mxu0 0.0
    %831 = vmatprep.subr.mxu0 0.0
    %832 = vmatpush1.msra.mxu0 0.0
    %833 = vmatprep.subr.mxu0 0.0
    %834 = vmatpush1.msra.mxu0 0.0
    %835 = vmatprep.subr.mxu0 0.0
    %836 = vmatpush1.msra.mxu0 0.0
    %837 = vmatprep.subr.mxu0 0.0
    %838 = vmatpush1.msra.mxu0 0.0
    %839 = vmatprep.subr.mxu0 0.0
    %840 = vmatpush1.msra.mxu0 0.0
    %841 = vmatprep.subr.mxu0 0.0
    %842 = vmatpush1.msra.mxu0 0.0
    %843 = vmatprep.subr.mxu0 0.0
    %844 = vmatpush1.msra.mxu0 0.0
    %845 = vmatprep.subr.mxu0 0.0
    %846 = vmatpush1.msra.mxu0 0.0
    %847 = vmatprep.subr.mxu0 0.0
    %848 = vmatpush1.msra.mxu0 0.0
    %849 = vmatprep.subr.mxu0 0.0
    %850 = vmatpush1.msra.mxu0 0.0
    %851 = vmatprep.subr.mxu0 0.0
    %852 = vmatpush1.msra.mxu0 0.0
    %853 = vmatprep.mubr.f32.mxu0 0.0
    %854 = vmatmul.mubr.f32.gmra.mrb[0].mxu0 %v788
    %v855 = vpop.f32.mrb[0].mxu0
    %v856 = vadd.f32 0.0, %v855
    %v857 = vpop.f32.mrb[0].mxu0
    %v858 = vadd.f32 0.0, %v857
    %859 = vdwg.mxu0
    %860 = vmatprep.subr.mxu0 %v386
    %861 = vmatpush1.msra.mxu0 %v385
    %862 = vmatprep.subr.mxu0 %v390
    %863 = vmatpush1.msra.mxu0 %v389
    %864 = vmatprep.subr.mxu0 %v394
    %865 = vmatpush1.msra.mxu0 %v393
    %866 = vmatprep.subr.mxu0 %v398
    %867 = vmatpush1.msra.mxu0 %v397
    %868 = vmatprep.subr.mxu0 %v402
    %869 = vmatpush1.msra.mxu0 %v401
    %870 = vmatprep.subr.mxu0 %v406
    %871 = vmatpush1.msra.mxu0 %v405
    %872 = vmatprep.subr.mxu0 %v410
    %873 = vmatpush1.msra.mxu0 %v409
    %874 = vmatprep.subr.mxu0 %v414
    %875 = vmatpush1.msra.mxu0 %v413
    %876 = vmatprep.subr.mxu0 %v418
    %877 = vmatpush1.msra.mxu0 %v417
    %878 = vmatprep.subr.mxu0 %v422
    %879 = vmatpush1.msra.mxu0 %v421
    %880 = vmatprep.subr.mxu0 %v426
    %881 = vmatpush1.msra.mxu0 %v425
    %882 = vmatprep.subr.mxu0 %v430
    %883 = vmatpush1.msra.mxu0 %v429
    %884 = vmatprep.subr.mxu0 %v434
    %885 = vmatpush1.msra.mxu0 %v433
    %886 = vmatprep.subr.mxu0 %v438
    %887 = vmatpush1.msra.mxu0 %v437
    %888 = vmatprep.subr.mxu0 %v442
    %889 = vmatpush1.msra.mxu0 %v441
    %890 = vmatprep.subr.mxu0 %v446
    %891 = vmatpush1.msra.mxu0 %v445
    %892 = vmatprep.subr.mxu0 0.0
    %893 = vmatpush1.msra.mxu0 0.0
    %894 = vmatprep.subr.mxu0 0.0
    %895 = vmatpush1.msra.mxu0 0.0
    %896 = vmatprep.subr.mxu0 0.0
    %897 = vmatpush1.msra.mxu0 0.0
    %898 = vmatprep.subr.mxu0 0.0
    %899 = vmatpush1.msra.mxu0 0.0
    %900 = vmatprep.subr.mxu0 0.0
    %901 = vmatpush1.msra.mxu0 0.0
    %902 = vmatprep.subr.mxu0 0.0
    %903 = vmatpush1.msra.mxu0 0.0
    %904 = vmatprep.subr.mxu0 0.0
    %905 = vmatpush1.msra.mxu0 0.0
    %906 = vmatprep.subr.mxu0 0.0
    %907 = vmatpush1.msra.mxu0 0.0
    %908 = vmatprep.subr.mxu0 0.0
    %909 = vmatpush1.msra.mxu0 0.0
    %910 = vmatprep.subr.mxu0 0.0
    %911 = vmatpush1.msra.mxu0 0.0
    %912 = vmatprep.subr.mxu0 0.0
    %913 = vmatpush1.msra.mxu0 0.0
    %914 = vmatprep.subr.mxu0 0.0
    %915 = vmatpush1.msra.mxu0 0.0
    %916 = vmatprep.subr.mxu0 0.0
    %917 = vmatpush1.msra.mxu0 0.0
    %918 = vmatprep.subr.mxu0 0.0
    %919 = vmatpush1.msra.mxu0 0.0
    %920 = vmatprep.subr.mxu0 0.0
    %921 = vmatpush1.msra.mxu0 0.0
    %922 = vmatprep.subr.mxu0 0.0
    %923 = vmatpush1.msra.mxu0 0.0
    %924 = vmatprep.mubr.f32.mxu0 0.0
    %925 = vmatmul.mubr.f32.gmra.mrb[0].mxu0 %v788
    %v926 = vpop.f32.mrb[0].mxu0
    %v927 = vadd.f32 0.0, %v926
    %v928 = vpop.f32.mrb[0].mxu0
    %v929 = vadd.f32 0.0, %v928
    %930 = vdwg.mxu0
    %v931 = vadd.f32 %v236, %v856
    %v932 = vadd.f32 %v238, %v858
    %v933 = vadd.f32 %v349, %v927
    %v934 = vadd.f32 %v351, %v929
    %v935 = vxor.u32 %v931, 2147483648
    %v936 = vxor.u32 %v932, 2147483648
    %v937 = vxor.u32 %v934, 2147483648
    %v938 = vmul.f32 %v935, 1.442695
    %v939 = vpow.pop %v938
    %v940 = vmul.f32 %v936, 1.442695
    %v941 = vpow.pop %v940
    %v942 = vmul.f32 %v937, 1.442695
    %v943 = vpow.pop %v942
    %v944 = vadd.f32 %v939, 1.0
    %v945 = vadd.f32 %v941, 1.0
    %v946 = vadd.f32 %v943, 1.0
    %v947 = vrcp.pop %v944
    %v948 = vmul.f32 1.0, %v947
    %v949 = vrcp.pop %v945
    %v950 = vmul.f32 1.0, %v949
    %v951 = vrcp.pop %v946
    %v952 = vmul.f32 1.0, %v951
    %v953 = vtanh.pop %v933
    %v954 = vmul.f32 %v950, %v786
    %v955 = vmul.f32 %v948, %v953
    %v956 = vadd.f32 %v954, %v955
    %v957 = vtanh.pop %v956
    %v958 = vmul.f32 %v952, %v957
    %959 = vmatprep.subr.mxu0 %v384
    %960 = vmatpush1.msra.mxu0 %v383
    %961 = vmatprep.subr.mxu0 %v388
    %962 = vmatpush1.msra.mxu0 %v387
    %963 = vmatprep.subr.mxu0 %v392
    %964 = vmatpush1.msra.mxu0 %v391
    %965 = vmatprep.subr.mxu0 %v396
    %966 = vmatpush1.msra.mxu0 %v395
    %967 = vmatprep.subr.mxu0 %v400
    %968 = vmatpush1.msra.mxu0 %v399
    %969 = vmatprep.subr.mxu0 %v404
    %970 = vmatpush1.msra.mxu0 %v403
    %971 = vmatprep.subr.mxu0 %v408
    %972 = vmatpush1.msra.mxu0 %v407
    %973 = vmatprep.subr.mxu0 %v412
    %974 = vmatpush1.msra.mxu0 %v411
    %975 = vmatprep.subr.mxu0 %v416
    %976 = vmatpush1.msra.mxu0 %v415
    %977 = vmatprep.subr.mxu0 %v420
    %978 = vmatpush1.msra.mxu0 %v419
    %979 = vmatprep.subr.mxu0 %v424
    %980 = vmatpush1.msra.mxu0 %v423
    %981 = vmatprep.subr.mxu0 %v428
    %982 = vmatpush1.msra.mxu0 %v427
    %983 = vmatprep.subr.mxu0 %v432
    %984 = vmatpush1.msra.mxu0 %v431
    %985 = vmatprep.subr.mxu0 %v436
    %986 = vmatpush1.msra.mxu0 %v435
    %987 = vmatprep.subr.mxu0 %v440
    %988 = vmatpush1.msra.mxu0 %v439
    %989 = vmatprep.subr.mxu0 %v444
    %990 = vmatpush1.msra.mxu0 %v443
    %991 = vmatprep.subr.mxu0 0.0
    %992 = vmatpush1.msra.mxu0 0.0
    %993 = vmatprep.subr.mxu0 0.0
    %994 = vmatpush1.msra.mxu0 0.0
    %995 = vmatprep.subr.mxu0 0.0
    %996 = vmatpush1.msra.mxu0 0.0
    %997 = vmatprep.subr.mxu0 0.0
    %998 = vmatpush1.msra.mxu0 0.0
    %999 = vmatprep.subr.mxu0 0.0
    %1000 = vmatpush1.msra.mxu0 0.0
    %1001 = vmatprep.subr.mxu0 0.0
    %1002 = vmatpush1.msra.mxu0 0.0
    %1003 = vmatprep.subr.mxu0 0.0
    %1004 = vmatpush1.msra.mxu0 0.0
    %1005 = vmatprep.subr.mxu0 0.0
    %1006 = vmatpush1.msra.mxu0 0.0
    %1007 = vmatprep.subr.mxu0 0.0
    %1008 = vmatpush1.msra.mxu0 0.0
    %1009 = vmatprep.subr.mxu0 0.0
    %1010 = vmatpush1.msra.mxu0 0.0
    %1011 = vmatprep.subr.mxu0 0.0
    %1012 = vmatpush1.msra.mxu0 0.0
    %1013 = vmatprep.subr.mxu0 0.0
    %1014 = vmatpush1.msra.mxu0 0.0
    %1015 = vmatprep.subr.mxu0 0.0
    %1016 = vmatpush1.msra.mxu0 0.0
    %1017 = vmatprep.subr.mxu0 0.0
    %1018 = vmatpush1.msra.mxu0 0.0
    %1019 = vmatprep.subr.mxu0 0.0
    %1020 = vmatpush1.msra.mxu0 0.0
    %1021 = vmatprep.subr.mxu0 0.0
    %1022 = vmatpush1.msra.mxu0 0.0
    %1023 = vmatprep.mubr.f32.mxu0 0.0
    %1024 = vmatmul.mubr.f32.gmra.mrb[0].mxu0 %v958
    %v1025 = vpop.f32.mrb[0].mxu0
    %v1026 = vadd.f32 0.0, %v1025
    %v1027 = vpop.f32.mrb[0].mxu0
    %v1028 = vadd.f32 0.0, %v1027
    %1029 = vdwg.mxu0
    %1030 = vmatprep.subr.mxu0 %v386
    %1031 = vmatpush1.msra.mxu0 %v385
    %1032 = vmatprep.subr.mxu0 %v390
    %1033 = vmatpush1.msra.mxu0 %v389
    %1034 = vmatprep.subr.mxu0 %v394
    %1035 = vmatpush1.msra.mxu0 %v393
    %1036 = vmatprep.subr.mxu0 %v398
    %1037 = vmatpush1.msra.mxu0 %v397
    %1038 = vmatprep.subr.mxu0 %v402
    %1039 = vmatpush1.msra.mxu0 %v401
    %1040 = vmatprep.subr.mxu0 %v406
    %1041 = vmatpush1.msra.mxu0 %v405
    %1042 = vmatprep.subr.mxu0 %v410
    %1043 = vmatpush1.msra.mxu0 %v409
    %1044 = vmatprep.subr.mxu0 %v414
    %1045 = vmatpush1.msra.mxu0 %v413
    %1046 = vmatprep.subr.mxu0 %v418
    %1047 = vmatpush1.msra.mxu0 %v417
    %1048 = vmatprep.subr.mxu0 %v422
    %1049 = vmatpush1.msra.mxu0 %v421
    %1050 = vmatprep.subr.mxu0 %v426
    %1051 = vmatpush1.msra.mxu0 %v425
    %1052 = vmatprep.subr.mxu0 %v430
    %1053 = vmatpush1.msra.mxu0 %v429
    %1054 = vmatprep.subr.mxu0 %v434
    %1055 = vmatpush1.msra.mxu0 %v433
    %1056 = vmatprep.subr.mxu0 %v438
    %1057 = vmatpush1.msra.mxu0 %v437
    %1058 = vmatprep.subr.mxu0 %v442
    %1059 = vmatpush1.msra.mxu0 %v441
    %1060 = vmatprep.subr.mxu0 %v446
    %1061 = vmatpush1.msra.mxu0 %v445
    %1062 = vmatprep.subr.mxu0 0.0
    %1063 = vmatpush1.msra.mxu0 0.0
    %1064 = vmatprep.subr.mxu0 0.0
    %1065 = vmatpush1.msra.mxu0 0.0
    %1066 = vmatprep.subr.mxu0 0.0
    %1067 = vmatpush1.msra.mxu0 0.0
    %1068 = vmatprep.subr.mxu0 0.0
    %1069 = vmatpush1.msra.mxu0 0.0
    %1070 = vmatprep.subr.mxu0 0.0
    %1071 = vmatpush1.msra.mxu0 0.0
    %1072 = vmatprep.subr.mxu0 0.0
    %1073 = vmatpush1.msra.mxu0 0.0
    %1074 = vmatprep.subr.mxu0 0.0
    %1075 = vmatpush1.msra.mxu0 0.0
    %1076 = vmatprep.subr.mxu0 0.0
    %1077 = vmatpush1.msra.mxu0 0.0
    %1078 = vmatprep.subr.mxu0 0.0
    %1079 = vmatpush1.msra.mxu0 0.0
    %1080 = vmatprep.subr.mxu0 0.0
    %1081 = vmatpush1.msra.mxu0 0.0
    %1082 = vmatprep.subr.mxu0 0.0
    %1083 = vmatpush1.msra.mxu0 0.0
    %1084 = vmatprep.subr.mxu0 0.0
    %1085 = vmatpush1.msra.mxu0 0.0
    %1086 = vmatprep.subr.mxu0 0.0
    %1087 = vmatpush1.msra.mxu0 0.0
    %1088 = vmatprep.subr.mxu0 0.0
    %1089 = vmatpush1.msra.mxu0 0.0
    %1090 = vmatprep.subr.mxu0 0.0
    %1091 = vmatpush1.msra.mxu0 0.0
    %1092 = vmatprep.subr.mxu0 0.0
    %1093 = vmatpush1.msra.mxu0 0.0
    %1094 = vmatprep.mubr.f32.mxu0 0.0
    %1095 = vmatmul.mubr.f32.gmra.mrb[0].mxu0 %v958
    %v1096 = vpop.f32.mrb[0].mxu0
    %v1097 = vadd.f32 0.0, %v1096
    %v1098 = vpop.f32.mrb[0].mxu0
    %v1099 = vadd.f32 0.0, %v1098
    %1100 = vdwg.mxu0
    %v1101 = vadd.f32 %v242, %v1026
    %v1102 = vadd.f32 %v244, %v1028
    %v1103 = vadd.f32 %v355, %v1097
    %v1104 = vadd.f32 %v357, %v1099
    %v1105 = vxor.u32 %v1101, 2147483648
    %v1106 = vxor.u32 %v1102, 2147483648
    %v1107 = vxor.u32 %v1104, 2147483648
    %v1108 = vmul.f32 %v1105, 1.442695
    %v1109 = vpow.pop %v1108
    %v1110 = vmul.f32 %v1106, 1.442695
    %v1111 = vpow.pop %v1110
    %v1112 = vmul.f32 %v1107, 1.442695
    %v1113 = vpow.pop %v1112
    %v1114 = vadd.f32 %v1109, 1.0
    %v1115 = vadd.f32 %v1111, 1.0
    %v1116 = vadd.f32 %v1113, 1.0
    %v1117 = vrcp.pop %v1114
    %v1118 = vmul.f32 1.0, %v1117
    %v1119 = vrcp.pop %v1115
    %v1120 = vmul.f32 1.0, %v1119
    %v1121 = vrcp.pop %v1116
    %v1122 = vmul.f32 1.0, %v1121
    %v1123 = vtanh.pop %v1103
    %v1124 = vmul.f32 %v1120, %v956
    %v1125 = vmul.f32 %v1118, %v1123
    %v1126 = vadd.f32 %v1124, %v1125
    %v1127 = vtanh.pop %v1126
    %v1128 = vmul.f32 %v1122, %v1127
    %1129 = vmatprep.subr.mxu0 %v384
    %1130 = vmatpush1.msra.mxu0 %v383
    %1131 = vmatprep.subr.mxu0 %v388
    %1132 = vmatpush1.msra.mxu0 %v387
    %1133 = vmatprep.subr.mxu0 %v392
    %1134 = vmatpush1.msra.mxu0 %v391
    %1135 = vmatprep.subr.mxu0 %v396
    %1136 = vmatpush1.msra.mxu0 %v395
    %1137 = vmatprep.subr.mxu0 %v400
    %1138 = vmatpush1.msra.mxu0 %v399
    %1139 = vmatprep.subr.mxu0 %v404
    %1140 = vmatpush1.msra.mxu0 %v403
    %1141 = vmatprep.subr.mxu0 %v408
    %1142 = vmatpush1.msra.mxu0 %v407
    %1143 = vmatprep.subr.mxu0 %v412
    %1144 = vmatpush1.msra.mxu0 %v411
    %1145 = vmatprep.subr.mxu0 %v416
    %1146 = vmatpush1.msra.mxu0 %v415
    %1147 = vmatprep.subr.mxu0 %v420
    %1148 = vmatpush1.msra.mxu0 %v419
    %1149 = vmatprep.subr.mxu0 %v424
    %1150 = vmatpush1.msra.mxu0 %v423
    %1151 = vmatprep.subr.mxu0 %v428
    %1152 = vmatpush1.msra.mxu0 %v427
    %1153 = vmatprep.subr.mxu0 %v432
    %1154 = vmatpush1.msra.mxu0 %v431
    %1155 = vmatprep.subr.mxu0 %v436
    %1156 = vmatpush1.msra.mxu0 %v435
    %1157 = vmatprep.subr.mxu0 %v440
    %1158 = vmatpush1.msra.mxu0 %v439
    %1159 = vmatprep.subr.mxu0 %v444
    %1160 = vmatpush1.msra.mxu0 %v443
    %1161 = vmatprep.subr.mxu0 0.0
    %1162 = vmatpush1.msra.mxu0 0.0
    %1163 = vmatprep.subr.mxu0 0.0
    %1164 = vmatpush1.msra.mxu0 0.0
    %1165 = vmatprep.subr.mxu0 0.0
    %1166 = vmatpush1.msra.mxu0 0.0
    %1167 = vmatprep.subr.mxu0 0.0
    %1168 = vmatpush1.msra.mxu0 0.0
    %1169 = vmatprep.subr.mxu0 0.0
    %1170 = vmatpush1.msra.mxu0 0.0
    %1171 = vmatprep.subr.mxu0 0.0
    %1172 = vmatpush1.msra.mxu0 0.0
    %1173 = vmatprep.subr.mxu0 0.0
    %1174 = vmatpush1.msra.mxu0 0.0
    %1175 = vmatprep.subr.mxu0 0.0
    %1176 = vmatpush1.msra.mxu0 0.0
    %1177 = vmatprep.subr.mxu0 0.0
    %1178 = vmatpush1.msra.mxu0 0.0
    %1179 = vmatprep.subr.mxu0 0.0
    %1180 = vmatpush1.msra.mxu0 0.0
    %1181 = vmatprep.subr.mxu0 0.0
    %1182 = vmatpush1.msra.mxu0 0.0
    %1183 = vmatprep.subr.mxu0 0.0
    %1184 = vmatpush1.msra.mxu0 0.0
    %1185 = vmatprep.subr.mxu0 0.0
    %1186 = vmatpush1.msra.mxu0 0.0
    %1187 = vmatprep.subr.mxu0 0.0
    %1188 = vmatpush1.msra.mxu0 0.0
    %1189 = vmatprep.subr.mxu0 0.0
    %1190 = vmatpush1.msra.mxu0 0.0
    %1191 = vmatprep.subr.mxu0 0.0
    %1192 = vmatpush1.msra.mxu0 0.0
    %1193 = vmatprep.mubr.f32.mxu0 0.0
    %1194 = vmatmul.mubr.f32.gmra.mrb[0].mxu0 %v1128
    %v1195 = vpop.f32.mrb[0].mxu0
    %v1196 = vadd.f32 0.0, %v1195
    %v1197 = vpop.f32.mrb[0].mxu0
    %v1198 = vadd.f32 0.0, %v1197
    %1199 = vdwg.mxu0
    %1200 = vmatprep.subr.mxu0 %v386
    %1201 = vmatpush1.msra.mxu0 %v385
    %1202 = vmatprep.subr.mxu0 %v390
    %1203 = vmatpush1.msra.mxu0 %v389
    %1204 = vmatprep.subr.mxu0 %v394
    %1205 = vmatpush1.msra.mxu0 %v393
    %1206 = vmatprep.subr.mxu0 %v398
    %1207 = vmatpush1.msra.mxu0 %v397
    %1208 = vmatprep.subr.mxu0 %v402
    %1209 = vmatpush1.msra.mxu0 %v401
    %1210 = vmatprep.subr.mxu0 %v406
    %1211 = vmatpush1.msra.mxu0 %v405
    %1212 = vmatprep.subr.mxu0 %v410
    %1213 = vmatpush1.msra.mxu0 %v409
    %1214 = vmatprep.subr.mxu0 %v414
    %1215 = vmatpush1.msra.mxu0 %v413
    %1216 = vmatprep.subr.mxu0 %v418
    %1217 = vmatpush1.msra.mxu0 %v417
    %1218 = vmatprep.subr.mxu0 %v422
    %1219 = vmatpush1.msra.mxu0 %v421
    %1220 = vmatprep.subr.mxu0 %v426
    %1221 = vmatpush1.msra.mxu0 %v425
    %1222 = vmatprep.subr.mxu0 %v430
    %1223 = vmatpush1.msra.mxu0 %v429
    %1224 = vmatprep.subr.mxu0 %v434
    %1225 = vmatpush1.msra.mxu0 %v433
    %1226 = vmatprep.subr.mxu0 %v438
    %1227 = vmatpush1.msra.mxu0 %v437
    %1228 = vmatprep.subr.mxu0 %v442
    %1229 = vmatpush1.msra.mxu0 %v441
    %1230 = vmatprep.subr.mxu0 %v446
    %1231 = vmatpush1.msra.mxu0 %v445
    %1232 = vmatprep.subr.mxu0 0.0
    %1233 = vmatpush1.msra.mxu0 0.0
    %1234 = vmatprep.subr.mxu0 0.0
    %1235 = vmatpush1.msra.mxu0 0.0
    %1236 = vmatprep.subr.mxu0 0.0
    %1237 = vmatpush1.msra.mxu0 0.0
    %1238 = vmatprep.subr.mxu0 0.0
    %1239 = vmatpush1.msra.mxu0 0.0
    %1240 = vmatprep.subr.mxu0 0.0
    %1241 = vmatpush1.msra.mxu0 0.0
    %1242 = vmatprep.subr.mxu0 0.0
    %1243 = vmatpush1.msra.mxu0 0.0
    %1244 = vmatprep.subr.mxu0 0.0
    %1245 = vmatpush1.msra.mxu0 0.0
    %1246 = vmatprep.subr.mxu0 0.0
    %1247 = vmatpush1.msra.mxu0 0.0
    %1248 = vmatprep.subr.mxu0 0.0
    %1249 = vmatpush1.msra.mxu0 0.0
    %1250 = vmatprep.subr.mxu0 0.0
    %1251 = vmatpush1.msra.mxu0 0.0
    %1252 = vmatprep.subr.mxu0 0.0
    %1253 = vmatpush1.msra.mxu0 0.0
    %1254 = vmatprep.subr.mxu0 0.0
    %1255 = vmatpush1.msra.mxu0 0.0
    %1256 = vmatprep.subr.mxu0 0.0
    %1257 = vmatpush1.msra.mxu0 0.0
    %1258 = vmatprep.subr.mxu0 0.0
    %1259 = vmatpush1.msra.mxu0 0.0
    %1260 = vmatprep.subr.mxu0 0.0
    %1261 = vmatpush1.msra.mxu0 0.0
    %1262 = vmatprep.subr.mxu0 0.0
    %1263 = vmatpush1.msra.mxu0 0.0
    %1264 = vmatprep.mubr.f32.mxu0 0.0
    %1265 = vmatmul.mubr.f32.gmra.mrb[0].mxu0 %v1128
    %v1266 = vpop.f32.mrb[0].mxu0
    %v1267 = vadd.f32 0.0, %v1266
    %v1268 = vpop.f32.mrb[0].mxu0
    %v1269 = vadd.f32 0.0, %v1268
    %1270 = vdwg.mxu0
    %v1271 = vadd.f32 %v248, %v1196
    %v1272 = vadd.f32 %v250, %v1198
    %v1273 = vadd.f32 %v361, %v1267
    %v1274 = vadd.f32 %v363, %v1269
    %v1275 = vxor.u32 %v1271, 2147483648
    %v1276 = vxor.u32 %v1272, 2147483648
    %v1277 = vxor.u32 %v1274, 2147483648
    %v1278 = vmul.f32 %v1275, 1.442695
    %v1279 = vpow.pop %v1278
    %v1280 = vmul.f32 %v1276, 1.442695
    %v1281 = vpow.pop %v1280
    %v1282 = vmul.f32 %v1277, 1.442695
    %v1283 = vpow.pop %v1282
    %v1284 = vadd.f32 %v1279, 1.0
    %v1285 = vadd.f32 %v1281, 1.0
    %v1286 = vadd.f32 %v1283, 1.0
    %v1287 = vrcp.pop %v1284
    %v1288 = vmul.f32 1.0, %v1287
    %v1289 = vrcp.pop %v1285
    %v1290 = vmul.f32 1.0, %v1289
    %v1291 = vrcp.pop %v1286
    %v1292 = vmul.f32 1.0, %v1291
    %v1293 = vtanh.pop %v1273
    %v1294 = vmul.f32 %v1290, %v1126
    %v1295 = vmul.f32 %v1288, %v1293
    %v1296 = vadd.f32 %v1294, %v1295
    %v1297 = vtanh.pop %v1296
    %v1298 = vmul.f32 %v1292, %v1297
    %1299 = vmatprep.subr.mxu0 %v384
    %1300 = vmatpush1.msra.mxu0 %v383
    %1301 = vmatprep.subr.mxu0 %v388
    %1302 = vmatpush1.msra.mxu0 %v387
    %1303 = vmatprep.subr.mxu0 %v392
    %1304 = vmatpush1.msra.mxu0 %v391
    %1305 = vmatprep.subr.mxu0 %v396
    %1306 = vmatpush1.msra.mxu0 %v395
    %1307 = vmatprep.subr.mxu0 %v400
    %1308 = vmatpush1.msra.mxu0 %v399
    %1309 = vmatprep.subr.mxu0 %v404
    %1310 = vmatpush1.msra.mxu0 %v403
    %1311 = vmatprep.subr.mxu0 %v408
    %1312 = vmatpush1.msra.mxu0 %v407
    %1313 = vmatprep.subr.mxu0 %v412
    %1314 = vmatpush1.msra.mxu0 %v411
    %1315 = vmatprep.subr.mxu0 %v416
    %1316 = vmatpush1.msra.mxu0 %v415
    %1317 = vmatprep.subr.mxu0 %v420
    %1318 = vmatpush1.msra.mxu0 %v419
    %1319 = vmatprep.subr.mxu0 %v424
    %1320 = vmatpush1.msra.mxu0 %v423
    %1321 = vmatprep.subr.mxu0 %v428
    %1322 = vmatpush1.msra.mxu0 %v427
    %1323 = vmatprep.subr.mxu0 %v432
    %1324 = vmatpush1.msra.mxu0 %v431
    %1325 = vmatprep.subr.mxu0 %v436
    %1326 = vmatpush1.msra.mxu0 %v435
    %1327 = vmatprep.subr.mxu0 %v440
    %1328 = vmatpush1.msra.mxu0 %v439
    %1329 = vmatprep.subr.mxu0 %v444
    %1330 = vmatpush1.msra.mxu0 %v443
    %1331 = vmatprep.subr.mxu0 0.0
    %1332 = vmatpush1.msra.mxu0 0.0
    %1333 = vmatprep.subr.mxu0 0.0
    %1334 = vmatpush1.msra.mxu0 0.0
    %1335 = vmatprep.subr.mxu0 0.0
    %1336 = vmatpush1.msra.mxu0 0.0
    %1337 = vmatprep.subr.mxu0 0.0
    %1338 = vmatpush1.msra.mxu0 0.0
    %1339 = vmatprep.subr.mxu0 0.0
    %1340 = vmatpush1.msra.mxu0 0.0
    %1341 = vmatprep.subr.mxu0 0.0
    %1342 = vmatpush1.msra.mxu0 0.0
    %1343 = vmatprep.subr.mxu0 0.0
    %1344 = vmatpush1.msra.mxu0 0.0
    %1345 = vmatprep.subr.mxu0 0.0
    %1346 = vmatpush1.msra.mxu0 0.0
    %1347 = vmatprep.subr.mxu0 0.0
    %1348 = vmatpush1.msra.mxu0 0.0
    %1349 = vmatprep.subr.mxu0 0.0
    %1350 = vmatpush1.msra.mxu0 0.0
    %1351 = vmatprep.subr.mxu0 0.0
    %1352 = vmatpush1.msra.mxu0 0.0
    %1353 = vmatprep.subr.mxu0 0.0
    %1354 = vmatpush1.msra.mxu0 0.0
    %1355 = vmatprep.subr.mxu0 0.0
    %1356 = vmatpush1.msra.mxu0 0.0
    %1357 = vmatprep.subr.mxu0 0.0
    %1358 = vmatpush1.msra.mxu0 0.0
    %1359 = vmatprep.subr.mxu0 0.0
    %1360 = vmatpush1.msra.mxu0 0.0
    %1361 = vmatprep.subr.mxu0 0.0
    %1362 = vmatpush1.msra.mxu0 0.0
    %1363 = vmatprep.mubr.f32.mxu0 0.0
    %1364 = vmatmul.mubr.f32.gmra.mrb[0].mxu0 %v1298
    %v1365 = vpop.f32.mrb[0].mxu0
    %v1366 = vadd.f32 0.0, %v1365
    %v1367 = vpop.f32.mrb[0].mxu0
    %v1368 = vadd.f32 0.0, %v1367
    %1369 = vdwg.mxu0
    %1370 = vmatprep.subr.mxu0 %v386
    %1371 = vmatpush1.msra.mxu0 %v385
    %1372 = vmatprep.subr.mxu0 %v390
    %1373 = vmatpush1.msra.mxu0 %v389
    %1374 = vmatprep.subr.mxu0 %v394
    %1375 = vmatpush1.msra.mxu0 %v393
    %1376 = vmatprep.subr.mxu0 %v398
    %1377 = vmatpush1.msra.mxu0 %v397
    %1378 = vmatprep.subr.mxu0 %v402
    %1379 = vmatpush1.msra.mxu0 %v401
    %1380 = vmatprep.subr.mxu0 %v406
    %1381 = vmatpush1.msra.mxu0 %v405
    %1382 = vmatprep.subr.mxu0 %v410
    %1383 = vmatpush1.msra.mxu0 %v409
    %1384 = vmatprep.subr.mxu0 %v414
    %1385 = vmatpush1.msra.mxu0 %v413
    %1386 = vmatprep.subr.mxu0 %v418
    %1387 = vmatpush1.msra.mxu0 %v417
    %1388 = vmatprep.subr.mxu0 %v422
    %1389 = vmatpush1.msra.mxu0 %v421
    %1390 = vmatprep.subr.mxu0 %v426
    %1391 = vmatpush1.msra.mxu0 %v425
    %1392 = vmatprep.subr.mxu0 %v430
    %1393 = vmatpush1.msra.mxu0 %v429
    %1394 = vmatprep.subr.mxu0 %v434
    %1395 = vmatpush1.msra.mxu0 %v433
    %1396 = vmatprep.subr.mxu0 %v438
    %1397 = vmatpush1.msra.mxu0 %v437
    %1398 = vmatprep.subr.mxu0 %v442
    %1399 = vmatpush1.msra.mxu0 %v441
    %1400 = vmatprep.subr.mxu0 %v446
    %1401 = vmatpush1.msra.mxu0 %v445
    %1402 = vmatprep.subr.mxu0 0.0
    %1403 = vmatpush1.msra.mxu0 0.0
    %1404 = vmatprep.subr.mxu0 0.0
    %1405 = vmatpush1.msra.mxu0 0.0
    %1406 = vmatprep.subr.mxu0 0.0
    %1407 = vmatpush1.msra.mxu0 0.0
    %1408 = vmatprep.subr.mxu0 0.0
    %1409 = vmatpush1.msra.mxu0 0.0
    %1410 = vmatprep.subr.mxu0 0.0
    %1411 = vmatpush1.msra.mxu0 0.0
    %1412 = vmatprep.subr.mxu0 0.0
    %1413 = vmatpush1.msra.mxu0 0.0
    %1414 = vmatprep.subr.mxu0 0.0
    %1415 = vmatpush1.msra.mxu0 0.0
    %1416 = vmatprep.subr.mxu0 0.0
    %1417 = vmatpush1.msra.mxu0 0.0
    %1418 = vmatprep.subr.mxu0 0.0
    %1419 = vmatpush1.msra.mxu0 0.0
    %1420 = vmatprep.subr.mxu0 0.0
    %1421 = vmatpush1.msra.mxu0 0.0
    %1422 = vmatprep.subr.mxu0 0.0
    %1423 = vmatpush1.msra.mxu0 0.0
    %1424 = vmatprep.subr.mxu0 0.0
    %1425 = vmatpush1.msra.mxu0 0.0
    %1426 = vmatprep.subr.mxu0 0.0
    %1427 = vmatpush1.msra.mxu0 0.0
    %1428 = vmatprep.subr.mxu0 0.0
    %1429 = vmatpush1.msra.mxu0 0.0
    %1430 = vmatprep.subr.mxu0 0.0
    %1431 = vmatpush1.msra.mxu0 0.0
    %1432 = vmatprep.subr.mxu0 0.0
    %1433 = vmatpush1.msra.mxu0 0.0
    %1434 = vmatprep.mubr.f32.mxu0 0.0
    %1435 = vmatmul.mubr.f32.gmra.mrb[0].mxu0 %v1298
    %v1436 = vpop.f32.mrb[0].mxu0
    %v1437 = vadd.f32 0.0, %v1436
    %v1438 = vpop.f32.mrb[0].mxu0
    %v1439 = vadd.f32 0.0, %v1438
    %1440 = vdwg.mxu0
    %v1441 = vadd.f32 %v254, %v1366
    %v1442 = vadd.f32 %v256, %v1368
    %v1443 = vadd.f32 %v367, %v1437
    %v1444 = vadd.f32 %v369, %v1439
    %v1445 = vxor.u32 %v1441, 2147483648
    %v1446 = vxor.u32 %v1442, 2147483648
    %v1447 = vxor.u32 %v1444, 2147483648
    %v1448 = vmul.f32 %v1445, 1.442695
    %v1449 = vpow.pop %v1448
    %v1450 = vmul.f32 %v1446, 1.442695
    %v1451 = vpow.pop %v1450
    %v1452 = vmul.f32 %v1447, 1.442695
    %v1453 = vpow.pop %v1452
    %v1454 = vadd.f32 %v1449, 1.0
    %v1455 = vadd.f32 %v1451, 1.0
    %v1456 = vadd.f32 %v1453, 1.0
    %v1457 = vrcp.pop %v1454
    %v1458 = vmul.f32 1.0, %v1457
    %v1459 = vrcp.pop %v1455
    %v1460 = vmul.f32 1.0, %v1459
    %v1461 = vrcp.pop %v1456
    %v1462 = vmul.f32 1.0, %v1461
    %v1463 = vtanh.pop %v1443
    %v1464 = vmul.f32 %v1460, %v1296
    %v1465 = vmul.f32 %v1458, %v1463
    %v1466 = vadd.f32 %v1464, %v1465
    %v1467 = vtanh.pop %v1466
    %v1468 = vmul.f32 %v1462, %v1467
    %1469 = vmatprep.subr.mxu0 %v384
    %1470 = vmatpush1.msra.mxu0 %v383
    %1471 = vmatprep.subr.mxu0 %v388
    %1472 = vmatpush1.msra.mxu0 %v387
    %1473 = vmatprep.subr.mxu0 %v392
    %1474 = vmatpush1.msra.mxu0 %v391
    %1475 = vmatprep.subr.mxu0 %v396
    %1476 = vmatpush1.msra.mxu0 %v395
    %1477 = vmatprep.subr.mxu0 %v400
    %1478 = vmatpush1.msra.mxu0 %v399
    %1479 = vmatprep.subr.mxu0 %v404
    %1480 = vmatpush1.msra.mxu0 %v403
    %1481 = vmatprep.subr.mxu0 %v408
    %1482 = vmatpush1.msra.mxu0 %v407
    %1483 = vmatprep.subr.mxu0 %v412
    %1484 = vmatpush1.msra.mxu0 %v411
    %1485 = vmatprep.subr.mxu0 %v416
    %1486 = vmatpush1.msra.mxu0 %v415
    %1487 = vmatprep.subr.mxu0 %v420
    %1488 = vmatpush1.msra.mxu0 %v419
    %1489 = vmatprep.subr.mxu0 %v424
    %1490 = vmatpush1.msra.mxu0 %v423
    %1491 = vmatprep.subr.mxu0 %v428
    %1492 = vmatpush1.msra.mxu0 %v427
    %1493 = vmatprep.subr.mxu0 %v432
    %1494 = vmatpush1.msra.mxu0 %v431
    %1495 = vmatprep.subr.mxu0 %v436
    %1496 = vmatpush1.msra.mxu0 %v435
    %1497 = vmatprep.subr.mxu0 %v440
    %1498 = vmatpush1.msra.mxu0 %v439
    %1499 = vmatprep.subr.mxu0 %v444
    %1500 = vmatpush1.msra.mxu0 %v443
    %1501 = vmatprep.subr.mxu0 0.0
    %1502 = vmatpush1.msra.mxu0 0.0
    %1503 = vmatprep.subr.mxu0 0.0
    %1504 = vmatpush1.msra.mxu0 0.0
    %1505 = vmatprep.subr.mxu0 0.0
    %1506 = vmatpush1.msra.mxu0 0.0
    %1507 = vmatprep.subr.mxu0 0.0
    %1508 = vmatpush1.msra.mxu0 0.0
    %1509 = vmatprep.subr.mxu0 0.0
    %1510 = vmatpush1.msra.mxu0 0.0
    %1511 = vmatprep.subr.mxu0 0.0
    %1512 = vmatpush1.msra.mxu0 0.0
    %1513 = vmatprep.subr.mxu0 0.0
    %1514 = vmatpush1.msra.mxu0 0.0
    %1515 = vmatprep.subr.mxu0 0.0
    %1516 = vmatpush1.msra.mxu0 0.0
    %1517 = vmatprep.subr.mxu0 0.0
    %1518 = vmatpush1.msra.mxu0 0.0
    %1519 = vmatprep.subr.mxu0 0.0
    %1520 = vmatpush1.msra.mxu0 0.0
    %1521 = vmatprep.subr.mxu0 0.0
    %1522 = vmatpush1.msra.mxu0 0.0
    %1523 = vmatprep.subr.mxu0 0.0
    %1524 = vmatpush1.msra.mxu0 0.0
    %1525 = vmatprep.subr.mxu0 0.0
    %1526 = vmatpush1.msra.mxu0 0.0
    %1527 = vmatprep.subr.mxu0 0.0
    %1528 = vmatpush1.msra.mxu0 0.0
    %1529 = vmatprep.subr.mxu0 0.0
    %1530 = vmatpush1.msra.mxu0 0.0
    %1531 = vmatprep.subr.mxu0 0.0
    %1532 = vmatpush1.msra.mxu0 0.0
    %1533 = vmatprep.mubr.f32.mxu0 0.0
    %1534 = vmatmul.mubr.f32.gmra.mrb[0].mxu0 %v1468
    %v1535 = vpop.f32.mrb[0].mxu0
    %v1536 = vadd.f32 0.0, %v1535
    %v1537 = vpop.f32.mrb[0].mxu0
    %v1538 = vadd.f32 0.0, %v1537
    %1539 = vdwg.mxu0
    %1540 = vmatprep.subr.mxu0 %v386
    %1541 = vmatpush1.msra.mxu0 %v385
    %1542 = vmatprep.subr.mxu0 %v390
    %1543 = vmatpush1.msra.mxu0 %v389
    %1544 = vmatprep.subr.mxu0 %v394
    %1545 = vmatpush1.msra.mxu0 %v393
    %1546 = vmatprep.subr.mxu0 %v398
    %1547 = vmatpush1.msra.mxu0 %v397
    %1548 = vmatprep.subr.mxu0 %v402
    %1549 = vmatpush1.msra.mxu0 %v401
    %1550 = vmatprep.subr.mxu0 %v406
    %1551 = vmatpush1.msra.mxu0 %v405
    %1552 = vmatprep.subr.mxu0 %v410
    %1553 = vmatpush1.msra.mxu0 %v409
    %1554 = vmatprep.subr.mxu0 %v414
    %1555 = vmatpush1.msra.mxu0 %v413
    %1556 = vmatprep.subr.mxu0 %v418
    %1557 = vmatpush1.msra.mxu0 %v417
    %1558 = vmatprep.subr.mxu0 %v422
    %1559 = vmatpush1.msra.mxu0 %v421
    %1560 = vmatprep.subr.mxu0 %v426
    %1561 = vmatpush1.msra.mxu0 %v425
    %1562 = vmatprep.subr.mxu0 %v430
    %1563 = vmatpush1.msra.mxu0 %v429
    %1564 = vmatprep.subr.mxu0 %v434
    %1565 = vmatpush1.msra.mxu0 %v433
    %1566 = vmatprep.subr.mxu0 %v438
    %1567 = vmatpush1.msra.mxu0 %v437
    %1568 = vmatprep.subr.mxu0 %v442
    %1569 = vmatpush1.msra.mxu0 %v441
    %1570 = vmatprep.subr.mxu0 %v446
    %1571 = vmatpush1.msra.mxu0 %v445
    %1572 = vmatprep.subr.mxu0 0.0
    %1573 = vmatpush1.msra.mxu0 0.0
    %1574 = vmatprep.subr.mxu0 0.0
    %1575 = vmatpush1.msra.mxu0 0.0
    %1576 = vmatprep.subr.mxu0 0.0
    %1577 = vmatpush1.msra.mxu0 0.0
    %1578 = vmatprep.subr.mxu0 0.0
    %1579 = vmatpush1.msra.mxu0 0.0
    %1580 = vmatprep.subr.mxu0 0.0
    %1581 = vmatpush1.msra.mxu0 0.0
    %1582 = vmatprep.subr.mxu0 0.0
    %1583 = vmatpush1.msra.mxu0 0.0
    %1584 = vmatprep.subr.mxu0 0.0
    %1585 = vmatpush1.msra.mxu0 0.0
    %1586 = vmatprep.subr.mxu0 0.0
    %1587 = vmatpush1.msra.mxu0 0.0
    %1588 = vmatprep.subr.mxu0 0.0
    %1589 = vmatpush1.msra.mxu0 0.0
    %1590 = vmatprep.subr.mxu0 0.0
    %1591 = vmatpush1.msra.mxu0 0.0
    %1592 = vmatprep.subr.mxu0 0.0
    %1593 = vmatpush1.msra.mxu0 0.0
    %1594 = vmatprep.subr.mxu0 0.0
    %1595 = vmatpush1.msra.mxu0 0.0
    %1596 = vmatprep.subr.mxu0 0.0
    %1597 = vmatpush1.msra.mxu0 0.0
    %1598 = vmatprep.subr.mxu0 0.0
    %1599 = vmatpush1.msra.mxu0 0.0
    %1600 = vmatprep.subr.mxu0 0.0
    %1601 = vmatpush1.msra.mxu0 0.0
    %1602 = vmatprep.subr.mxu0 0.0
    %1603 = vmatpush1.msra.mxu0 0.0
    %1604 = vmatprep.mubr.f32.mxu0 0.0
    %1605 = vmatmul.mubr.f32.gmra.mrb[0].mxu0 %v1468
    %v1606 = vpop.f32.mrb[0].mxu0
    %v1607 = vadd.f32 0.0, %v1606
    %v1608 = vpop.f32.mrb[0].mxu0
    %v1609 = vadd.f32 0.0, %v1608
    %1610 = vdwg.mxu0
    %v1611 = vadd.f32 %v260, %v1536
    %v1612 = vadd.f32 %v262, %v1538
    %v1613 = vadd.f32 %v373, %v1607
    %v1614 = vadd.f32 %v375, %v1609
    %v1615 = vxor.u32 %v1611, 2147483648
    %v1616 = vxor.u32 %v1612, 2147483648
    %v1617 = vxor.u32 %v1614, 2147483648
    %v1618 = vmul.f32 %v1615, 1.442695
    %v1619 = vpow.pop %v1618
    %v1620 = vmul.f32 %v1616, 1.442695
    %v1621 = vpow.pop %v1620
    %v1622 = vmul.f32 %v1617, 1.442695
    %v1623 = vpow.pop %v1622
    %v1624 = vadd.f32 %v1619, 1.0
    %v1625 = vadd.f32 %v1621, 1.0
    %v1626 = vadd.f32 %v1623, 1.0
    %v1627 = vrcp.pop %v1624
    %v1628 = vmul.f32 1.0, %v1627
    %v1629 = vrcp.pop %v1625
    %v1630 = vmul.f32 1.0, %v1629
    %v1631 = vrcp.pop %v1626
    %v1632 = vmul.f32 1.0, %v1631
    %v1633 = vtanh.pop %v1613
    %v1634 = vmul.f32 %v1630, %v1466
    %v1635 = vmul.f32 %v1628, %v1633
    %v1636 = vadd.f32 %v1634, %v1635
    %v1637 = vtanh.pop %v1636
    %v1638 = vmul.f32 %v1632, %v1637
    %1639 = vmatprep.subr.mxu0 %v384
    %1640 = vmatpush1.msra.mxu0 %v383
    %1641 = vmatprep.subr.mxu0 %v388
    %1642 = vmatpush1.msra.mxu0 %v387
    %1643 = vmatprep.subr.mxu0 %v392
    %1644 = vmatpush1.msra.mxu0 %v391
    %1645 = vmatprep.subr.mxu0 %v396
    %1646 = vmatpush1.msra.mxu0 %v395
    %1647 = vmatprep.subr.mxu0 %v400
    %1648 = vmatpush1.msra.mxu0 %v399
    %1649 = vmatprep.subr.mxu0 %v404
    %1650 = vmatpush1.msra.mxu0 %v403
    %1651 = vmatprep.subr.mxu0 %v408
    %1652 = vmatpush1.msra.mxu0 %v407
    %1653 = vmatprep.subr.mxu0 %v412
    %1654 = vmatpush1.msra.mxu0 %v411
    %1655 = vmatprep.subr.mxu0 %v416
    %1656 = vmatpush1.msra.mxu0 %v415
    %1657 = vmatprep.subr.mxu0 %v420
    %1658 = vmatpush1.msra.mxu0 %v419
    %1659 = vmatprep.subr.mxu0 %v424
    %1660 = vmatpush1.msra.mxu0 %v423
    %1661 = vmatprep.subr.mxu0 %v428
    %1662 = vmatpush1.msra.mxu0 %v427
    %1663 = vmatprep.subr.mxu0 %v432
    %1664 = vmatpush1.msra.mxu0 %v431
    %1665 = vmatprep.subr.mxu0 %v436
    %1666 = vmatpush1.msra.mxu0 %v435
    %1667 = vmatprep.subr.mxu0 %v440
    %1668 = vmatpush1.msra.mxu0 %v439
    %1669 = vmatprep.subr.mxu0 %v444
    %1670 = vmatpush1.msra.mxu0 %v443
    %1671 = vmatprep.subr.mxu0 0.0
    %1672 = vmatpush1.msra.mxu0 0.0
    %1673 = vmatprep.subr.mxu0 0.0
    %1674 = vmatpush1.msra.mxu0 0.0
    %1675 = vmatprep.subr.mxu0 0.0
    %1676 = vmatpush1.msra.mxu0 0.0
    %1677 = vmatprep.subr.mxu0 0.0
    %1678 = vmatpush1.msra.mxu0 0.0
    %1679 = vmatprep.subr.mxu0 0.0
    %1680 = vmatpush1.msra.mxu0 0.0
    %1681 = vmatprep.subr.mxu0 0.0
    %1682 = vmatpush1.msra.mxu0 0.0
    %1683 = vmatprep.subr.mxu0 0.0
    %1684 = vmatpush1.msra.mxu0 0.0
    %1685 = vmatprep.subr.mxu0 0.0
    %1686 = vmatpush1.msra.mxu0 0.0
    %1687 = vmatprep.subr.mxu0 0.0
    %1688 = vmatpush1.msra.mxu0 0.0
    %1689 = vmatprep.subr.mxu0 0.0
    %1690 = vmatpush1.msra.mxu0 0.0
    %1691 = vmatprep.subr.mxu0 0.0
    %1692 = vmatpush1.msra.mxu0 0.0
    %1693 = vmatprep.subr.mxu0 0.0
    %1694 = vmatpush1.msra.mxu0 0.0
    %1695 = vmatprep.subr.mxu0 0.0
    %1696 = vmatpush1.msra.mxu0 0.0
    %1697 = vmatprep.subr.mxu0 0.0
    %1698 = vmatpush1.msra.mxu0 0.0
    %1699 = vmatprep.subr.mxu0 0.0
    %1700 = vmatpush1.msra.mxu0 0.0
    %1701 = vmatprep.subr.mxu0 0.0
    %1702 = vmatpush1.msra.mxu0 0.0
    %1703 = vmatprep.mubr.f32.mxu0 0.0
    %1704 = vmatmul.mubr.f32.gmra.mrb[0].mxu0 %v1638
    %v1705 = vpop.f32.mrb[0].mxu0
    %v1706 = vadd.f32 0.0, %v1705
    %v1707 = vpop.f32.mrb[0].mxu0
    %v1708 = vadd.f32 0.0, %v1707
    %1709 = vdwg.mxu0
    %1710 = vmatprep.subr.mxu0 %v386
    %1711 = vmatpush1.msra.mxu0 %v385
    %1712 = vmatprep.subr.mxu0 %v390
    %1713 = vmatpush1.msra.mxu0 %v389
    %1714 = vmatprep.subr.mxu0 %v394
    %1715 = vmatpush1.msra.mxu0 %v393
    %1716 = vmatprep.subr.mxu0 %v398
    %1717 = vmatpush1.msra.mxu0 %v397
    %1718 = vmatprep.subr.mxu0 %v402
    %1719 = vmatpush1.msra.mxu0 %v401
    %1720 = vmatprep.subr.mxu0 %v406
    %1721 = vmatpush1.msra.mxu0 %v405
    %1722 = vmatprep.subr.mxu0 %v410
    %1723 = vmatpush1.msra.mxu0 %v409
    %1724 = vmatprep.subr.mxu0 %v414
    %1725 = vmatpush1.msra.mxu0 %v413
    %1726 = vmatprep.subr.mxu0 %v418
    %1727 = vmatpush1.msra.mxu0 %v417
    %1728 = vmatprep.subr.mxu0 %v422
    %1729 = vmatpush1.msra.mxu0 %v421
    %1730 = vmatprep.subr.mxu0 %v426
    %1731 = vmatpush1.msra.mxu0 %v425
    %1732 = vmatprep.subr.mxu0 %v430
    %1733 = vmatpush1.msra.mxu0 %v429
    %1734 = vmatprep.subr.mxu0 %v434
    %1735 = vmatpush1.msra.mxu0 %v433
    %1736 = vmatprep.subr.mxu0 %v438
    %1737 = vmatpush1.msra.mxu0 %v437
    %1738 = vmatprep.subr.mxu0 %v442
    %1739 = vmatpush1.msra.mxu0 %v441
    %1740 = vmatprep.subr.mxu0 %v446
    %1741 = vmatpush1.msra.mxu0 %v445
    %1742 = vmatprep.subr.mxu0 0.0
    %1743 = vmatpush1.msra.mxu0 0.0
    %1744 = vmatprep.subr.mxu0 0.0
    %1745 = vmatpush1.msra.mxu0 0.0
    %1746 = vmatprep.subr.mxu0 0.0
    %1747 = vmatpush1.msra.mxu0 0.0
    %1748 = vmatprep.subr.mxu0 0.0
    %1749 = vmatpush1.msra.mxu0 0.0
    %1750 = vmatprep.subr.mxu0 0.0
    %1751 = vmatpush1.msra.mxu0 0.0
    %1752 = vmatprep.subr.mxu0 0.0
    %1753 = vmatpush1.msra.mxu0 0.0
    %1754 = vmatprep.subr.mxu0 0.0
    %1755 = vmatpush1.msra.mxu0 0.0
    %1756 = vmatprep.subr.mxu0 0.0
    %1757 = vmatpush1.msra.mxu0 0.0
    %1758 = vmatprep.subr.mxu0 0.0
    %1759 = vmatpush1.msra.mxu0 0.0
    %1760 = vmatprep.subr.mxu0 0.0
    %1761 = vmatpush1.msra.mxu0 0.0
    %1762 = vmatprep.subr.mxu0 0.0
    %1763 = vmatpush1.msra.mxu0 0.0
    %1764 = vmatprep.subr.mxu0 0.0
    %1765 = vmatpush1.msra.mxu0 0.0
    %1766 = vmatprep.subr.mxu0 0.0
    %1767 = vmatpush1.msra.mxu0 0.0
    %1768 = vmatprep.subr.mxu0 0.0
    %1769 = vmatpush1.msra.mxu0 0.0
    %1770 = vmatprep.subr.mxu0 0.0
    %1771 = vmatpush1.msra.mxu0 0.0
    %1772 = vmatprep.subr.mxu0 0.0
    %1773 = vmatpush1.msra.mxu0 0.0
    %1774 = vmatprep.mubr.f32.mxu0 0.0
    %1775 = vmatmul.mubr.f32.gmra.mrb[0].mxu0 %v1638
    %v1776 = vpop.f32.mrb[0].mxu0
    %v1777 = vadd.f32 0.0, %v1776
    %v1778 = vpop.f32.mrb[0].mxu0
    %v1779 = vadd.f32 0.0, %v1778
    %1780 = vdwg.mxu0
    %v1781 = vadd.f32 %v266, %v1706
    %v1782 = vadd.f32 %v268, %v1708
    %v1783 = vadd.f32 %v379, %v1777
    %v1784 = vadd.f32 %v381, %v1779
    %v1785 = vxor.u32 %v1781, 2147483648
    %v1786 = vxor.u32 %v1782, 2147483648
    %v1787 = vxor.u32 %v1784, 2147483648
    %v1788 = vmul.f32 %v1785, 1.442695
    %v1789 = vpow.pop %v1788
    %v1790 = vmul.f32 %v1786, 1.442695
    %v1791 = vpow.pop %v1790
    %v1792 = vmul.f32 %v1787, 1.442695
    %v1793 = vpow.pop %v1792
    %v1794 = vadd.f32 %v1789, 1.0
    %v1795 = vadd.f32 %v1791, 1.0
    %v1796 = vadd.f32 %v1793, 1.0
    %v1797 = vrcp.pop %v1794
    %v1798 = vmul.f32 1.0, %v1797
    %v1799 = vrcp.pop %v1795
    %v1800 = vmul.f32 1.0, %v1799
    %v1801 = vrcp.pop %v1796
    %v1802 = vmul.f32 1.0, %v1801
    %v1803 = vtanh.pop %v1783
    %v1804 = vmul.f32 %v1800, %v1636
    %v1805 = vmul.f32 %v1798, %v1803
    %v1806 = vadd.f32 %v1804, %v1805
    %v1807 = vtanh.pop %v1806
    %v1808 = vmul.f32 %v1802, %v1807
    %1809 = vst [vmem:[#allocation12] sm:$0xff] %v1808
    %1810 = vst [vmem:[#allocation14] sm:$0xff] %v1806
    %v1811 = vld [vmem:[#allocation10] sm:$0xff]
    %v1812 = vld [vmem:[#allocation10 + $0x8] sm:$0xff]
    %v1813 = vld [vmem:[#allocation10 + $0x10] sm:$0xff]
    %v1814 = vld [vmem:[#allocation10 + $0x18] sm:$0xff]
    %v1815 = vld [vmem:[#allocation10 + $0x20] sm:$0xff]
    %v1816 = vld [vmem:[#allocation10 + $0x28] sm:$0xff]
    %v1817 = vld [vmem:[#allocation10 + $0x30] sm:$0xff]
    %v1818 = vld [vmem:[#allocation10 + $0x38] sm:$0xff]
    %v1819 = vld [vmem:[#allocation10 + $0x40] sm:$0xff]
    %v1820 = vld [vmem:[#allocation10 + $0x48] sm:$0xff]
    %v1821 = vld [vmem:[#allocation10 + $0x50] sm:$0xff]
    %v1822 = vld [vmem:[#allocation10 + $0x58] sm:$0xff]
    %v1823 = vld [vmem:[#allocation10 + $0x60] sm:$0xff]
    %v1824 = vld [vmem:[#allocation10 + $0x68] sm:$0xff]
    %v1825 = vld [vmem:[#allocation10 + $0x70] sm:$0xff]
    %v1826 = vld [vmem:[#allocation10 + $0x78] sm:$0xff]
    %v1827 = vld [vmem:[%s7] sm:$0x1]
    %v1829 = vlaneseq
    %v1830 = vshrl.u32 %v1829, 7
    %v1831 = vsub.s32 0, %v1830
    %v1832 = vrot.slane %v1827, %v1831
    %1834 = vmatprep.subr.mxu0 0.0
    %1835 = vmatpush1.msra.mxu0 %v1811
    %1836 = vmatprep.subr.mxu0 0.0
    %1837 = vmatpush1.msra.mxu0 %v1812
    %1838 = vmatprep.subr.mxu0 0.0
    %1839 = vmatpush1.msra.mxu0 %v1813
    %1840 = vmatprep.subr.mxu0 0.0
    %1841 = vmatpush1.msra.mxu0 %v1814
    %1842 = vmatprep.subr.mxu0 0.0
    %1843 = vmatpush1.msra.mxu0 %v1815
    %1844 = vmatprep.subr.mxu0 0.0
    %1845 = vmatpush1.msra.mxu0 %v1816
    %1846 = vmatprep.subr.mxu0 0.0
    %1847 = vmatpush1.msra.mxu0 %v1817
    %1848 = vmatprep.subr.mxu0 0.0
    %1849 = vmatpush1.msra.mxu0 %v1818
    %1850 = vmatprep.subr.mxu0 0.0
    %1851 = vmatpush1.msra.mxu0 %v1819
    %1852 = vmatprep.subr.mxu0 0.0
    %1853 = vmatpush1.msra.mxu0 %v1820
    %1854 = vmatprep.subr.mxu0 0.0
    %1855 = vmatpush1.msra.mxu0 %v1821
    %1856 = vmatprep.subr.mxu0 0.0
    %1857 = vmatpush1.msra.mxu0 %v1822
    %1858 = vmatprep.subr.mxu0 0.0
    %1859 = vmatpush1.msra.mxu0 %v1823
    %1860 = vmatprep.subr.mxu0 0.0
    %1861 = vmatpush1.msra.mxu0 %v1824
    %1862 = vmatprep.subr.mxu0 0.0
    %1863 = vmatpush1.msra.mxu0 %v1825
    %1864 = vmatprep.subr.mxu0 0.0
    %1865 = vmatpush1.msra.mxu0 %v1826
    %1866 = vmatprep.subr.mxu0 0.0
    %1867 = vmatpush1.msra.mxu0 0.0
    %1868 = vmatprep.subr.mxu0 0.0
    %1869 = vmatpush1.msra.mxu0 0.0
    %1870 = vmatprep.subr.mxu0 0.0
    %1871 = vmatpush1.msra.mxu0 0.0
    %1872 = vmatprep.subr.mxu0 0.0
    %1873 = vmatpush1.msra.mxu0 0.0
    %1874 = vmatprep.subr.mxu0 0.0
    %1875 = vmatpush1.msra.mxu0 0.0
    %1876 = vmatprep.subr.mxu0 0.0
    %1877 = vmatpush1.msra.mxu0 0.0
    %1878 = vmatprep.subr.mxu0 0.0
    %1879 = vmatpush1.msra.mxu0 0.0
    %1880 = vmatprep.subr.mxu0 0.0
    %1881 = vmatpush1.msra.mxu0 0.0
    %1882 = vmatprep.subr.mxu0 0.0
    %1883 = vmatpush1.msra.mxu0 0.0
    %1884 = vmatprep.subr.mxu0 0.0
    %1885 = vmatpush1.msra.mxu0 0.0
    %1886 = vmatprep.subr.mxu0 0.0
    %1887 = vmatpush1.msra.mxu0 0.0
    %1888 = vmatprep.subr.mxu0 0.0
    %1889 = vmatpush1.msra.mxu0 0.0
    %1890 = vmatprep.subr.mxu0 0.0
    %1891 = vmatpush1.msra.mxu0 0.0
    %1892 = vmatprep.subr.mxu0 0.0
    %1893 = vmatpush1.msra.mxu0 0.0
    %1894 = vmatprep.subr.mxu0 0.0
    %1895 = vmatpush1.msra.mxu0 0.0
    %1896 = vmatprep.subr.mxu0 0.0
    %1897 = vmatpush1.msra.mxu0 0.0
    %1898 = vmatprep.mubr.f32.mxu0 0.0
    %1899 = vmatmul.mubr.f32.gmra.mrb[0].mxu0 %v618
    %v1900 = vpop.f32.mrb[0].mxu0
    %v1901 = vadd.f32 %v1832, %v1900
    %v1902 = vpop.f32.mrb[0].mxu0
    %1903 = vmatprep.mubr.f32.mxu0 0.0
    %1904 = vmatmul.mubr.f32.gmra.mrb[0].mxu0 %v788
    %v1905 = vpop.f32.mrb[0].mxu0
    %v1906 = vadd.f32 %v1832, %v1905
    %v1907 = vpop.f32.mrb[0].mxu0
    %1908 = vmatprep.mubr.f32.mxu0 0.0
    %1909 = vmatmul.mubr.f32.gmra.mrb[0].mxu0 %v958
    %v1910 = vpop.f32.mrb[0].mxu0
    %v1911 = vadd.f32 %v1832, %v1910
    %v1912 = vpop.f32.mrb[0].mxu0
    %1913 = vmatprep.mubr.f32.mxu0 0.0
    %1914 = vmatmul.mubr.f32.gmra.mrb[0].mxu0 %v1128
    %v1915 = vpop.f32.mrb[0].mxu0
    %v1916 = vadd.f32 %v1832, %v1915
    %v1917 = vpop.f32.mrb[0].mxu0
    %1918 = vmatprep.mubr.f32.mxu0 0.0
    %1919 = vmatmul.mubr.f32.gmra.mrb[0].mxu0 %v1298
    %v1920 = vpop.f32.mrb[0].mxu0
    %v1921 = vadd.f32 %v1832, %v1920
    %v1922 = vpop.f32.mrb[0].mxu0
    %1923 = vmatprep.mubr.f32.mxu0 0.0
    %1924 = vmatmul.mubr.f32.gmra.mrb[0].mxu0 %v1468
    %v1925 = vpop.f32.mrb[0].mxu0
    %v1926 = vadd.f32 %v1832, %v1925
    %v1927 = vpop.f32.mrb[0].mxu0
    %1928 = vmatprep.mubr.f32.mxu0 0.0
    %1929 = vmatmul.mubr.f32.gmra.mrb[0].mxu0 %v1638
    %v1930 = vpop.f32.mrb[0].mxu0
    %v1931 = vadd.f32 %v1832, %v1930
    %v1932 = vpop.f32.mrb[0].mxu0
    %1933 = vmatprep.mubr.f32.mxu0 0.0
    %1934 = vmatmul.mubr.f32.gmra.mrb[0].mxu0 %v1808
    %v1935 = vpop.f32.mrb[0].mxu0
    %v1936 = vadd.f32 %v1832, %v1935
    %v1937 = vpop.f32.mrb[0].mxu0
    %1938 = vdwg.mxu0
    %1939 = vst [vmem:[#allocation11] sm:$0xff] %v1901
    %1940 = vst [vmem:[#allocation11 + $0x8] sm:$0xff] %v1906
    %1941 = vst [vmem:[#allocation11 + $0x10] sm:$0xff] %v1911
    %1942 = vst [vmem:[#allocation11 + $0x18] sm:$0xff] %v1916
    %1943 = vst [vmem:[#allocation11 + $0x20] sm:$0xff] %v1921
    %1944 = vst [vmem:[#allocation11 + $0x28] sm:$0xff] %v1926
    %1945 = vst [vmem:[#allocation11 + $0x30] sm:$0xff] %v1931
    %1946 = vst [vmem:[#allocation11 + $0x38] sm:$0xff] %v1936
    // Predicated region
    $region54: #{tpu_custom_call.1} parent=1 // pred_check
      _
    $region55: #{tpu_custom_call.1} parent=1 // pred_check_branch
      %1948 = sbr.rel (0) target = $region57
    $region56: #{tpu_custom_call.1} parent=1 // pred_region
      %s1950 = ssub.s32 1024, 1024
      %1951 = vsyncadd [#allocation4], %s1950
      %s1952 = sshll.u32 [#allocation11], 4
      %s1953 = int_to_ptr.vmem [resolvable:$true] %s1952
      %1958 = dma.vmem_to_hbm [thread:$0]  %s1953, 1024, %s8, [#allocation4], 128, 128, 8
    $region57: #{tpu_custom_call.1} parent=1 // pred_fallthru
      _
    // Predicated region
    $region58: #{tpu_custom_call.1} parent=1 // pred_check
      _
    $region59: #{tpu_custom_call.1} parent=1 // pred_check_branch
      %1960 = sbr.rel (0) target = $region61
    $region60: #{tpu_custom_call.1} parent=1 // pred_region
      %s1962 = ssub.s32 128, 128
      %1963 = vsyncadd [#allocation13], %s1962
      %s1965 = sshll.u32 [#allocation12], 4
      %s1966 = int_to_ptr.vmem [resolvable:$true] %s1965
      %1968 = dma.vmem_to_hbm [thread:$0]  %s1966, 128, %s9, [#allocation13]
    $region61: #{tpu_custom_call.1} parent=1 // pred_fallthru
      _
    // Predicated region
    $region62: #{tpu_custom_call.1} parent=1 // pred_check
      _
    $region63: #{tpu_custom_call.1} parent=1 // pred_check_branch
      %1970 = sbr.rel (0) target = $region65
    $region64: #{tpu_custom_call.1} parent=1 // pred_region
      %s1972 = ssub.s32 128, 128
      %1973 = vsyncadd [#allocation13], %s1972
      %s1975 = sshll.u32 [#allocation14], 4
      %s1976 = int_to_ptr.vmem [resolvable:$true] %s1975
      %1978 = dma.vmem_to_hbm [thread:$0]  %s1976, 128, %s10, [#allocation13]
    $region65: #{tpu_custom_call.1} parent=1 // pred_fallthru
      _
    // Predicated region
    $region66: #{tpu_custom_call.1} parent=1 // pred_check
      _
    $region67: #{tpu_custom_call.1} parent=1 // pred_check_branch
      %1980 = sbr.rel (0) target = $region69
    $region68: #{tpu_custom_call.1} parent=1 // pred_region
      %1981 = dma.done [#allocation4], 1024
    $region69: #{tpu_custom_call.1} parent=1 // pred_fallthru
      _
    // Predicated region
    $region70: #{tpu_custom_call.1} parent=1 // pred_check
      _
    $region71: #{tpu_custom_call.1} parent=1 // pred_check_branch
      %1983 = sbr.rel (0) target = $region73
    $region72: #{tpu_custom_call.1} parent=1 // pred_region
      %1984 = dma.done [#allocation13], 128
    $region73: #{tpu_custom_call.1} parent=1 // pred_fallthru
      _
    // Predicated region
    $region74: #{tpu_custom_call.1} parent=1 // pred_check
      _
    $region75: #{tpu_custom_call.1} parent=1 // pred_check_branch
      %1986 = sbr.rel (0) target = $region77
    $region76: #{tpu_custom_call.1} parent=1 // pred_region
      %1987 = dma.done [#allocation13], 128
    $region77: #{tpu_custom_call.1} parent=1 // pred_fallthru
      _
    %1988 = vsyncpa [#allocation3], 1
    %1989 = vsyncpa [#allocation6], 1
    %1990 = vsyncpa [#allocation9], 1
    %1991 = vsyncpa [#allocation4], 1
    %1992 = vsyncpa [#allocation13], 1

</llo_original>
